<compile_context>
chip_gen: v5e
topology: v5e:2x2
jax: 0.10.0
libtpu: 0.0.40
codegen_flags: <defaults>
</compile_context>

<pallas_src>
import functools

import jax
import jax.numpy as jnp
from jax.experimental import pallas as pl
from jax.experimental.pallas import tpu as pltpu

EPS = 1e-5          # BatchNorm eps
NEG_SLOPE = 0.2     # GAT LeakyReLU slope
FUSED_EMBEDDING_DIM = 512


def _vmem_spec():
    return pl.BlockSpec(memory_space=pltpu.MemorySpace.VMEM)


# ----------------------------------------------------------------------------
# Fused kernel: adjacency build + GCNx3 + GAT + BN/ReLU + mean-pool + fc
# ----------------------------------------------------------------------------
def fused_gcn_kernel(edge_ref, batch_ref, x_ref,
                     w1_ref, b1_ref, g1_ref, be1_ref,
                     w2_ref, b2_ref, g2_ref, be2_ref,
                     w3_ref, b3_ref, g3_ref, be3_ref,
                     wg_ref, asrc_ref, adst_ref, bg_ref, gg_ref, beg_ref,
                     wfc_ref, bfc_ref, o_ref,
                     *, n, e, g, heads, feat):
    f32 = jnp.float32
    bf16 = jnp.bfloat16

    # ---- dense normalized adjacency from edge_index (built in-kernel) ------
    # one-hot incidence: D[i, k] = (dst_k == i), S[j, k] = (src_k == j)
    node_iota = jax.lax.broadcasted_iota(jnp.int32, (n, e), 0)
    src_row = edge_ref[0:1, :]                       # [1, E]
    dst_row = edge_ref[1:2, :]                       # [1, E]
    d_onehot = (node_iota == dst_row).astype(f32)    # [N, E]
    s_onehot = (node_iota == src_row).astype(f32)    # [N, E]
    # A[i, j] = #edges j -> i  (MXU "NT" matmul contracting over edges)
    adj = jax.lax.dot_general(d_onehot, s_onehot,
                              dimension_numbers=(((1,), (1,)), ((), ())),
                              preferred_element_type=f32)        # [N, N]
    ii = jax.lax.broadcasted_iota(jnp.int32, (n, n), 0)
    jj = jax.lax.broadcasted_iota(jnp.int32, (n, n), 1)
    a_sl = adj + (ii == jj).astype(f32)              # add self-loops
    deg = jnp.sum(a_sl, axis=1, keepdims=True)       # in-degree + 1, [N, 1]
    dinv = jax.lax.rsqrt(deg)
    a_hat = (dinv * a_sl) * jnp.transpose(dinv)      # D^-1/2 (A+I) D^-1/2
    a_hat_bf = a_hat.astype(bf16)
    adj_mask = a_sl > 0.0                            # GAT mask (incl. self-loops)

    # ---- 3 x (GCNConv + BatchNorm + ReLU), all in f32 accum ------------------
    def gcn_bn_relu(h, w_ref, b_ref, gam_ref, bet_ref):
        xw = jnp.dot(h.astype(bf16), w_ref[...], preferred_element_type=f32)
        agg = jnp.dot(a_hat_bf, xw.astype(bf16), preferred_element_type=f32)
        agg = agg + b_ref[...]
        mu = jnp.mean(agg, axis=0, keepdims=True)
        var = jnp.mean((agg - mu) ** 2, axis=0, keepdims=True)
        hn = (agg - mu) * jax.lax.rsqrt(var + EPS) * gam_ref[...] + bet_ref[...]
        return jnp.maximum(hn, 0.0)

    h = gcn_bn_relu(x_ref[...], w1_ref, b1_ref, g1_ref, be1_ref)
    h = gcn_bn_relu(h, w2_ref, b2_ref, g2_ref, be2_ref)
    h = gcn_bn_relu(h, w3_ref, b3_ref, g3_ref, be3_ref)

    # ---- GATConv (heads, concat=False -> mean) + BatchNorm + ReLU -----------
    xw = jnp.dot(h.astype(bf16), wg_ref[...], preferred_element_type=f32)  # [N, H*F]
    xw_bf = xw.astype(bf16)
    # all-heads attention logits with one matmul each (block-diagonal a vecs)
    alpha_src = jnp.dot(xw_bf, asrc_ref[...], preferred_element_type=f32)  # [N, H]
    alpha_dst = jnp.dot(xw_bf, adst_ref[...], preferred_element_type=f32)  # [N, H]

    acc = jnp.zeros((n, feat), f32)
    for hd in range(heads):            # heads is small & static -> unrolled
        logits = alpha_dst[:, hd:hd + 1] + jnp.transpose(alpha_src[:, hd:hd + 1])
        logits = jnp.where(logits > 0, logits, NEG_SLOPE * logits)   # LeakyReLU
        logits = jnp.where(adj_mask, logits, f32(-1e30))             # mask non-edges
        logits = logits - jnp.max(logits, axis=1, keepdims=True)
        p = jnp.exp(logits)
        p = p * pl.reciprocal(jnp.sum(p, axis=1, keepdims=True), approx=True)
        xw_h = xw_bf[:, hd * feat:(hd + 1) * feat]                    # [N, F]
        acc = acc + jnp.dot(p.astype(bf16), xw_h, preferred_element_type=f32)

    gat = acc * f32(1.0 / heads) + bg_ref[...]
    mu = jnp.mean(gat, axis=0, keepdims=True)
    var = jnp.mean((gat - mu) ** 2, axis=0, keepdims=True)
    gat = (gat - mu) * jax.lax.rsqrt(var + EPS) * gg_ref[...] + beg_ref[...]
    gat = jnp.maximum(gat, 0.0)

    # ---- global_mean_pool + fc + ReLU (fused finalize) -----------------------
    g_iota = jax.lax.broadcasted_iota(jnp.int32, (g, n), 0)
    onehot = (g_iota == batch_ref[...]).astype(f32)                   # [G, N]
    counts = jnp.maximum(jnp.sum(onehot, axis=1, keepdims=True), 1.0)
    pool = onehot / counts
    pooled = jnp.dot(pool, gat, preferred_element_type=f32)           # [G, F]
    y = jnp.dot(pooled.astype(bf16), wfc_ref[...], preferred_element_type=f32)
    o_ref[...] = jnp.maximum(y + bfc_ref[...], 0.0)                   # [G, 512]


# ----------------------------------------------------------------------------
# Plain-JAX glue: parameters + forward wrapper
# ----------------------------------------------------------------------------
def glorot(key, shape, dtype=jnp.float32):
    lim = (6.0 / (shape[0] + shape[1])) ** 0.5
    return jax.random.uniform(key, shape, jnp.float32, -lim, lim).astype(dtype)


def init_params(key, in_ch, hidden, out_ch, gat_out, heads):
    ks = jax.random.split(key, 8)
    bf = jnp.bfloat16
    return {
        # GCNConv weights stored [Cin, Cout]; MXU operands kept in bf16.
        "w1": glorot(ks[0], (in_ch, hidden), bf),
        "b1": jnp.zeros((1, hidden), jnp.float32),
        "g1": jnp.ones((1, hidden), jnp.float32),
        "be1": jnp.zeros((1, hidden), jnp.float32),
        "w2": glorot(ks[1], (hidden, hidden * 2), bf),
        "b2": jnp.zeros((1, hidden * 2), jnp.float32),
        "g2": jnp.ones((1, hidden * 2), jnp.float32),
        "be2": jnp.zeros((1, hidden * 2), jnp.float32),
        "w3": glorot(ks[2], (hidden * 2, out_ch), bf),
        "b3": jnp.zeros((1, out_ch), jnp.float32),
        "g3": jnp.ones((1, out_ch), jnp.float32),
        "be3": jnp.zeros((1, out_ch), jnp.float32),
        # GATConv (in_features = out_ch as required by the forward pass)
        "wg": glorot(ks[3], (out_ch, heads * gat_out), bf),
        "a_src": glorot(ks[4], (heads, gat_out)),
        "a_dst": glorot(ks[5], (heads, gat_out)),
        "bg": jnp.zeros((1, gat_out), jnp.float32),
        "gg": jnp.ones((1, gat_out), jnp.float32),
        "beg": jnp.zeros((1, gat_out), jnp.float32),
        # fc
        "wfc": glorot(ks[6], (gat_out, FUSED_EMBEDDING_DIM), bf),
        "bfc": jnp.zeros((1, FUSED_EMBEDDING_DIM), jnp.float32),
    }


def _block_diag_att(a):
    """[heads, feat] -> [heads*feat, heads] block-diagonal attention matrix."""
    h, f = a.shape
    eye = jnp.eye(h, dtype=a.dtype)
    return (a[:, :, None] * eye[:, None, :]).reshape(h * f, h).astype(jnp.bfloat16)


@functools.partial(jax.jit, static_argnames=("num_graphs", "heads", "gat_out"))
def gcn_forward(params, x, edge_index, batch, *, num_graphs, heads, gat_out):
    n = x.shape[0]
    e = edge_index.shape[1]
    asrc_bd = _block_diag_att(params["a_src"])
    adst_bd = _block_diag_att(params["a_dst"])
    batch2d = batch.reshape(1, n).astype(jnp.int32)

    kernel = functools.partial(fused_gcn_kernel, n=n, e=e, g=num_graphs,
                               heads=heads, feat=gat_out)
    return pl.pallas_call(
        kernel,
        out_shape=jax.ShapeDtypeStruct((num_graphs, FUSED_EMBEDDING_DIM),
                                       jnp.float32),
        in_specs=[_vmem_spec()] * 23,
        out_specs=_vmem_spec(),
    )(edge_index.astype(jnp.int32), batch2d, x,
      params["w1"], params["b1"], params["g1"], params["be1"],
      params["w2"], params["b2"], params["g2"], params["be2"],
      params["w3"], params["b3"], params["g3"], params["be3"],
      params["wg"], asrc_bd, adst_bd,
      params["bg"], params["gg"], params["beg"],
      params["wfc"], params["bfc"])


if __name__ == "__main__":
    # Small, shape-consistent configuration:
    #   in_channels=8, hidden_channels=16, out_channels=32 (=2*hidden),
    #   gat_out_channels=32, heads=4, fused_embedding_dim=512
    N, E, G = 64, 128, 2
    IN_CH, HIDDEN, OUT_CH, GAT_OUT, HEADS = 8, 16, 32, 32, 4

    key = jax.random.PRNGKey(0)
    kx, ke, kp = jax.random.split(key, 3)

    x = jax.random.normal(kx, (N, IN_CH), jnp.float32)
    edge_index = jax.random.randint(ke, (2, E), 0, N, dtype=jnp.int32)
    batch = jnp.concatenate(
        [jnp.zeros((N // 2,), jnp.int32), jnp.ones((N - N // 2,), jnp.int32)])

    params = init_params(kp, IN_CH, HIDDEN, OUT_CH, GAT_OUT, HEADS)

    out = gcn_forward(params, x, edge_index, batch,
                      num_graphs=G, heads=HEADS, gat_out=GAT_OUT)
    out = jax.block_until_ready(out)

    assert out.shape == (G, FUSED_EMBEDDING_DIM)
    assert bool(jnp.all(jnp.isfinite(out)))
    print("KERNEL_OK")
</pallas_src>

<mosaic_0001>
module attributes {stable_mosaic.version = 11 : i64} {
  func.func @fused_gcn_kernel(%arg0: memref<2x128xi32, #tpu.memory_space<vmem>>, %arg1: memref<1x64xi32, #tpu.memory_space<vmem>>, %arg2: memref<64x8xf32, #tpu.memory_space<vmem>>, %arg3: memref<8x16xbf16, #tpu.memory_space<vmem>>, %arg4: memref<1x16xf32, #tpu.memory_space<vmem>>, %arg5: memref<1x16xf32, #tpu.memory_space<vmem>>, %arg6: memref<1x16xf32, #tpu.memory_space<vmem>>, %arg7: memref<16x32xbf16, #tpu.memory_space<vmem>>, %arg8: memref<1x32xf32, #tpu.memory_space<vmem>>, %arg9: memref<1x32xf32, #tpu.memory_space<vmem>>, %arg10: memref<1x32xf32, #tpu.memory_space<vmem>>, %arg11: memref<32x32xbf16, #tpu.memory_space<vmem>>, %arg12: memref<1x32xf32, #tpu.memory_space<vmem>>, %arg13: memref<1x32xf32, #tpu.memory_space<vmem>>, %arg14: memref<1x32xf32, #tpu.memory_space<vmem>>, %arg15: memref<32x128xbf16, #tpu.memory_space<vmem>>, %arg16: memref<128x4xbf16, #tpu.memory_space<vmem>>, %arg17: memref<128x4xbf16, #tpu.memory_space<vmem>>, %arg18: memref<1x32xf32, #tpu.memory_space<vmem>>, %arg19: memref<1x32xf32, #tpu.memory_space<vmem>>, %arg20: memref<1x32xf32, #tpu.memory_space<vmem>>, %arg21: memref<32x512xbf16, #tpu.memory_space<vmem>>, %arg22: memref<1x512xf32, #tpu.memory_space<vmem>>, %arg23: memref<2x512xf32, #tpu.memory_space<vmem>>) attributes {dimension_semantics = [], scalar_prefetch = 0 : i64, scratch_operands = 0 : i64, tpu.core_type = #tpu.core_type<tc>} {
    %0 = tpu.iota {dimensions = array<i32: 0>} : vector<64x128xi32>
    %c0 = arith.constant 0 : index
    %c0_0 = arith.constant 0 : index
    %1 = vector.load %arg0[%c0, %c0_0] : memref<2x128xi32, #tpu.memory_space<vmem>>, vector<1x128xi32>
    %c1 = arith.constant 1 : index
    %c0_1 = arith.constant 0 : index
    %2 = vector.load %arg0[%c1, %c0_1] : memref<2x128xi32, #tpu.memory_space<vmem>>, vector<1x128xi32>
    %3 = vector.broadcast %2 : vector<1x128xi32> to vector<64x128xi32>
    %4 = arith.cmpi eq, %0, %3 : vector<64x128xi32>
    %5 = arith.extui %4 : vector<64x128xi1> to vector<64x128xi32>
    %6 = arith.sitofp %5 : vector<64x128xi32> to vector<64x128xf32>
    %7 = vector.broadcast %1 : vector<1x128xi32> to vector<64x128xi32>
    %8 = arith.cmpi eq, %0, %7 : vector<64x128xi32>
    %9 = arith.extui %8 : vector<64x128xi1> to vector<64x128xi32>
    %10 = arith.sitofp %9 : vector<64x128xi32> to vector<64x128xf32>
    %cst = arith.constant dense<0.000000e+00> : vector<64x64xf32>
    %11 = tpu.matmul %6, %10, %cst {dimension_numbers = #tpu.dot_dimension_numbers<[1], [1], [0], [0], [0, 0, 1, 0], [], []>} : vector<64x128xf32>, vector<64x128xf32>, vector<64x64xf32> -> vector<64x64xf32>
    %12 = tpu.iota {dimensions = array<i32: 0>} : vector<64x64xi32>
    %13 = tpu.iota {dimensions = array<i32: 1>} : vector<64x64xi32>
    %14 = arith.cmpi eq, %12, %13 : vector<64x64xi32>
    %15 = arith.extui %14 : vector<64x64xi1> to vector<64x64xi32>
    %16 = arith.sitofp %15 : vector<64x64xi32> to vector<64x64xf32>
    %17 = arith.addf %11, %16 : vector<64x64xf32>
    %cst_2 = arith.constant dense<0.000000e+00> : vector<64xf32>
    %18 = vector.multi_reduction <add>, %17, %cst_2 [1] : vector<64x64xf32> to vector<64xf32>
    %19 = vector.shape_cast %18 : vector<64xf32> to vector<64x1xf32>
    %20 = math.rsqrt %19 : vector<64x1xf32>
    %21 = vector.broadcast %20 : vector<64x1xf32> to vector<64x64xf32>
    %22 = arith.mulf %21, %17 : vector<64x64xf32>
    %23 = tpu.transpose %20, [1, 0] : vector<64x1xf32> -> vector<1x64xf32>
    %24 = vector.broadcast %23 : vector<1x64xf32> to vector<64x64xf32>
    %25 = arith.mulf %22, %24 : vector<64x64xf32>
    %26 = arith.truncf %25 : vector<64x64xf32> to vector<64x64xbf16>
    %cst_3 = arith.constant 0.000000e+00 : f32
    %27 = vector.broadcast %cst_3 : f32 to vector<64x64xf32>
    %28 = arith.cmpf ogt, %17, %27 : vector<64x64xf32>
    %c0_4 = arith.constant 0 : index
    %c0_5 = arith.constant 0 : index
    %29 = vector.load %arg2[%c0_4, %c0_5] : memref<64x8xf32, #tpu.memory_space<vmem>>, vector<64x8xf32>
    %30 = arith.truncf %29 : vector<64x8xf32> to vector<64x8xbf16>
    %c0_6 = arith.constant 0 : index
    %c0_7 = arith.constant 0 : index
    %31 = vector.load %arg3[%c0_6, %c0_7] : memref<8x16xbf16, #tpu.memory_space<vmem>>, vector<8x16xbf16>
    %cst_8 = arith.constant dense<0.000000e+00> : vector<64x16xf32>
    %32 = tpu.matmul %30, %31, %cst_8 {dimension_numbers = #tpu.dot_dimension_numbers<[1], [0], [0], [1], [0, 0, 1, 1], [], []>} : vector<64x8xbf16>, vector<8x16xbf16>, vector<64x16xf32> -> vector<64x16xf32>
    %33 = arith.truncf %32 : vector<64x16xf32> to vector<64x16xbf16>
    %cst_9 = arith.constant dense<0.000000e+00> : vector<64x16xf32>
    %34 = tpu.matmul %26, %33, %cst_9 {dimension_numbers = #tpu.dot_dimension_numbers<[1], [0], [0], [1], [0, 0, 1, 1], [], []>} : vector<64x64xbf16>, vector<64x16xbf16>, vector<64x16xf32> -> vector<64x16xf32>
    %c0_10 = arith.constant 0 : index
    %c0_11 = arith.constant 0 : index
    %35 = vector.load %arg4[%c0_10, %c0_11] : memref<1x16xf32, #tpu.memory_space<vmem>>, vector<1x16xf32>
    %36 = vector.broadcast %35 : vector<1x16xf32> to vector<64x16xf32>
    %37 = arith.addf %34, %36 : vector<64x16xf32>
    %cst_12 = arith.constant dense<0.000000e+00> : vector<16xf32>
    %38 = vector.multi_reduction <add>, %37, %cst_12 [0] : vector<64x16xf32> to vector<16xf32>
    %39 = vector.shape_cast %38 : vector<16xf32> to vector<1x16xf32>
    %cst_13 = arith.constant 6.400000e+01 : f32
    %40 = vector.broadcast %cst_13 : f32 to vector<1x16xf32>
    %41 = arith.divf %39, %40 : vector<1x16xf32>
    %42 = vector.broadcast %41 : vector<1x16xf32> to vector<64x16xf32>
    %43 = arith.subf %37, %42 : vector<64x16xf32>
    %44 = arith.mulf %43, %43 : vector<64x16xf32>
    %cst_14 = arith.constant dense<0.000000e+00> : vector<16xf32>
    %45 = vector.multi_reduction <add>, %44, %cst_14 [0] : vector<64x16xf32> to vector<16xf32>
    %46 = vector.shape_cast %45 : vector<16xf32> to vector<1x16xf32>
    %cst_15 = arith.constant 6.400000e+01 : f32
    %47 = vector.broadcast %cst_15 : f32 to vector<1x16xf32>
    %48 = arith.divf %46, %47 : vector<1x16xf32>
    %49 = vector.broadcast %41 : vector<1x16xf32> to vector<64x16xf32>
    %50 = arith.subf %37, %49 : vector<64x16xf32>
    %cst_16 = arith.constant 9.99999974E-6 : f32
    %51 = vector.broadcast %cst_16 : f32 to vector<1x16xf32>
    %52 = arith.addf %48, %51 : vector<1x16xf32>
    %53 = math.rsqrt %52 : vector<1x16xf32>
    %54 = vector.broadcast %53 : vector<1x16xf32> to vector<64x16xf32>
    %55 = arith.mulf %50, %54 : vector<64x16xf32>
    %c0_17 = arith.constant 0 : index
    %c0_18 = arith.constant 0 : index
    %56 = vector.load %arg5[%c0_17, %c0_18] : memref<1x16xf32, #tpu.memory_space<vmem>>, vector<1x16xf32>
    %57 = vector.broadcast %56 : vector<1x16xf32> to vector<64x16xf32>
    %58 = arith.mulf %55, %57 : vector<64x16xf32>
    %c0_19 = arith.constant 0 : index
    %c0_20 = arith.constant 0 : index
    %59 = vector.load %arg6[%c0_19, %c0_20] : memref<1x16xf32, #tpu.memory_space<vmem>>, vector<1x16xf32>
    %60 = vector.broadcast %59 : vector<1x16xf32> to vector<64x16xf32>
    %61 = arith.addf %58, %60 : vector<64x16xf32>
    %cst_21 = arith.constant 0.000000e+00 : f32
    %62 = vector.broadcast %cst_21 : f32 to vector<64x16xf32>
    %63 = arith.maximumf %61, %62 : vector<64x16xf32>
    %64 = arith.truncf %63 : vector<64x16xf32> to vector<64x16xbf16>
    %c0_22 = arith.constant 0 : index
    %c0_23 = arith.constant 0 : index
    %65 = vector.load %arg7[%c0_22, %c0_23] : memref<16x32xbf16, #tpu.memory_space<vmem>>, vector<16x32xbf16>
    %cst_24 = arith.constant dense<0.000000e+00> : vector<64x32xf32>
    %66 = tpu.matmul %64, %65, %cst_24 {dimension_numbers = #tpu.dot_dimension_numbers<[1], [0], [0], [1], [0, 0, 1, 1], [], []>} : vector<64x16xbf16>, vector<16x32xbf16>, vector<64x32xf32> -> vector<64x32xf32>
    %67 = arith.truncf %66 : vector<64x32xf32> to vector<64x32xbf16>
    %cst_25 = arith.constant dense<0.000000e+00> : vector<64x32xf32>
    %68 = tpu.matmul %26, %67, %cst_25 {dimension_numbers = #tpu.dot_dimension_numbers<[1], [0], [0], [1], [0, 0, 1, 1], [], []>} : vector<64x64xbf16>, vector<64x32xbf16>, vector<64x32xf32> -> vector<64x32xf32>
    %c0_26 = arith.constant 0 : index
    %c0_27 = arith.constant 0 : index
    %69 = vector.load %arg8[%c0_26, %c0_27] : memref<1x32xf32, #tpu.memory_space<vmem>>, vector<1x32xf32>
    %70 = vector.broadcast %69 : vector<1x32xf32> to vector<64x32xf32>
    %71 = arith.addf %68, %70 : vector<64x32xf32>
    %cst_28 = arith.constant dense<0.000000e+00> : vector<32xf32>
    %72 = vector.multi_reduction <add>, %71, %cst_28 [0] : vector<64x32xf32> to vector<32xf32>
    %73 = vector.shape_cast %72 : vector<32xf32> to vector<1x32xf32>
    %cst_29 = arith.constant 6.400000e+01 : f32
    %74 = vector.broadcast %cst_29 : f32 to vector<1x32xf32>
    %75 = arith.divf %73, %74 : vector<1x32xf32>
    %76 = vector.broadcast %75 : vector<1x32xf32> to vector<64x32xf32>
    %77 = arith.subf %71, %76 : vector<64x32xf32>
    %78 = arith.mulf %77, %77 : vector<64x32xf32>
    %cst_30 = arith.constant dense<0.000000e+00> : vector<32xf32>
    %79 = vector.multi_reduction <add>, %78, %cst_30 [0] : vector<64x32xf32> to vector<32xf32>
    %80 = vector.shape_cast %79 : vector<32xf32> to vector<1x32xf32>
    %cst_31 = arith.constant 6.400000e+01 : f32
    %81 = vector.broadcast %cst_31 : f32 to vector<1x32xf32>
    %82 = arith.divf %80, %81 : vector<1x32xf32>
    %83 = vector.broadcast %75 : vector<1x32xf32> to vector<64x32xf32>
    %84 = arith.subf %71, %83 : vector<64x32xf32>
    %cst_32 = arith.constant 9.99999974E-6 : f32
    %85 = vector.broadcast %cst_32 : f32 to vector<1x32xf32>
    %86 = arith.addf %82, %85 : vector<1x32xf32>
    %87 = math.rsqrt %86 : vector<1x32xf32>
    %88 = vector.broadcast %87 : vector<1x32xf32> to vector<64x32xf32>
    %89 = arith.mulf %84, %88 : vector<64x32xf32>
    %c0_33 = arith.constant 0 : index
    %c0_34 = arith.constant 0 : index
    %90 = vector.load %arg9[%c0_33, %c0_34] : memref<1x32xf32, #tpu.memory_space<vmem>>, vector<1x32xf32>
    %91 = vector.broadcast %90 : vector<1x32xf32> to vector<64x32xf32>
    %92 = arith.mulf %89, %91 : vector<64x32xf32>
    %c0_35 = arith.constant 0 : index
    %c0_36 = arith.constant 0 : index
    %93 = vector.load %arg10[%c0_35, %c0_36] : memref<1x32xf32, #tpu.memory_space<vmem>>, vector<1x32xf32>
    %94 = vector.broadcast %93 : vector<1x32xf32> to vector<64x32xf32>
    %95 = arith.addf %92, %94 : vector<64x32xf32>
    %cst_37 = arith.constant 0.000000e+00 : f32
    %96 = vector.broadcast %cst_37 : f32 to vector<64x32xf32>
    %97 = arith.maximumf %95, %96 : vector<64x32xf32>
    %98 = arith.truncf %97 : vector<64x32xf32> to vector<64x32xbf16>
    %c0_38 = arith.constant 0 : index
    %c0_39 = arith.constant 0 : index
    %99 = vector.load %arg11[%c0_38, %c0_39] : memref<32x32xbf16, #tpu.memory_space<vmem>>, vector<32x32xbf16>
    %cst_40 = arith.constant dense<0.000000e+00> : vector<64x32xf32>
    %100 = tpu.matmul %98, %99, %cst_40 {dimension_numbers = #tpu.dot_dimension_numbers<[1], [0], [0], [1], [0, 0, 1, 1], [], []>} : vector<64x32xbf16>, vector<32x32xbf16>, vector<64x32xf32> -> vector<64x32xf32>
    %101 = arith.truncf %100 : vector<64x32xf32> to vector<64x32xbf16>
    %cst_41 = arith.constant dense<0.000000e+00> : vector<64x32xf32>
    %102 = tpu.matmul %26, %101, %cst_41 {dimension_numbers = #tpu.dot_dimension_numbers<[1], [0], [0], [1], [0, 0, 1, 1], [], []>} : vector<64x64xbf16>, vector<64x32xbf16>, vector<64x32xf32> -> vector<64x32xf32>
    %c0_42 = arith.constant 0 : index
    %c0_43 = arith.constant 0 : index
    %103 = vector.load %arg12[%c0_42, %c0_43] : memref<1x32xf32, #tpu.memory_space<vmem>>, vector<1x32xf32>
    %104 = vector.broadcast %103 : vector<1x32xf32> to vector<64x32xf32>
    %105 = arith.addf %102, %104 : vector<64x32xf32>
    %cst_44 = arith.constant dense<0.000000e+00> : vector<32xf32>
    %106 = vector.multi_reduction <add>, %105, %cst_44 [0] : vector<64x32xf32> to vector<32xf32>
    %107 = vector.shape_cast %106 : vector<32xf32> to vector<1x32xf32>
    %cst_45 = arith.constant 6.400000e+01 : f32
    %108 = vector.broadcast %cst_45 : f32 to vector<1x32xf32>
    %109 = arith.divf %107, %108 : vector<1x32xf32>
    %110 = vector.broadcast %109 : vector<1x32xf32> to vector<64x32xf32>
    %111 = arith.subf %105, %110 : vector<64x32xf32>
    %112 = arith.mulf %111, %111 : vector<64x32xf32>
    %cst_46 = arith.constant dense<0.000000e+00> : vector<32xf32>
    %113 = vector.multi_reduction <add>, %112, %cst_46 [0] : vector<64x32xf32> to vector<32xf32>
    %114 = vector.shape_cast %113 : vector<32xf32> to vector<1x32xf32>
    %cst_47 = arith.constant 6.400000e+01 : f32
    %115 = vector.broadcast %cst_47 : f32 to vector<1x32xf32>
    %116 = arith.divf %114, %115 : vector<1x32xf32>
    %117 = vector.broadcast %109 : vector<1x32xf32> to vector<64x32xf32>
    %118 = arith.subf %105, %117 : vector<64x32xf32>
    %cst_48 = arith.constant 9.99999974E-6 : f32
    %119 = vector.broadcast %cst_48 : f32 to vector<1x32xf32>
    %120 = arith.addf %116, %119 : vector<1x32xf32>
    %121 = math.rsqrt %120 : vector<1x32xf32>
    %122 = vector.broadcast %121 : vector<1x32xf32> to vector<64x32xf32>
    %123 = arith.mulf %118, %122 : vector<64x32xf32>
    %c0_49 = arith.constant 0 : index
    %c0_50 = arith.constant 0 : index
    %124 = vector.load %arg13[%c0_49, %c0_50] : memref<1x32xf32, #tpu.memory_space<vmem>>, vector<1x32xf32>
    %125 = vector.broadcast %124 : vector<1x32xf32> to vector<64x32xf32>
    %126 = arith.mulf %123, %125 : vector<64x32xf32>
    %c0_51 = arith.constant 0 : index
    %c0_52 = arith.constant 0 : index
    %127 = vector.load %arg14[%c0_51, %c0_52] : memref<1x32xf32, #tpu.memory_space<vmem>>, vector<1x32xf32>
    %128 = vector.broadcast %127 : vector<1x32xf32> to vector<64x32xf32>
    %129 = arith.addf %126, %128 : vector<64x32xf32>
    %cst_53 = arith.constant 0.000000e+00 : f32
    %130 = vector.broadcast %cst_53 : f32 to vector<64x32xf32>
    %131 = arith.maximumf %129, %130 : vector<64x32xf32>
    %132 = arith.truncf %131 : vector<64x32xf32> to vector<64x32xbf16>
    %c0_54 = arith.constant 0 : index
    %c0_55 = arith.constant 0 : index
    %133 = vector.load %arg15[%c0_54, %c0_55] : memref<32x128xbf16, #tpu.memory_space<vmem>>, vector<32x128xbf16>
    %cst_56 = arith.constant dense<0.000000e+00> : vector<64x128xf32>
    %134 = tpu.matmul %132, %133, %cst_56 {dimension_numbers = #tpu.dot_dimension_numbers<[1], [0], [0], [1], [0, 0, 1, 1], [], []>} : vector<64x32xbf16>, vector<32x128xbf16>, vector<64x128xf32> -> vector<64x128xf32>
    %135 = arith.truncf %134 : vector<64x128xf32> to vector<64x128xbf16>
    %c0_57 = arith.constant 0 : index
    %c0_58 = arith.constant 0 : index
    %136 = vector.load %arg16[%c0_57, %c0_58] : memref<128x4xbf16, #tpu.memory_space<vmem>>, vector<128x4xbf16>
    %cst_59 = arith.constant dense<0.000000e+00> : vector<64x4xf32>
    %137 = tpu.matmul %135, %136, %cst_59 {dimension_numbers = #tpu.dot_dimension_numbers<[1], [0], [0], [1], [0, 0, 1, 1], [], []>} : vector<64x128xbf16>, vector<128x4xbf16>, vector<64x4xf32> -> vector<64x4xf32>
    %c0_60 = arith.constant 0 : index
    %c0_61 = arith.constant 0 : index
    %138 = vector.load %arg17[%c0_60, %c0_61] : memref<128x4xbf16, #tpu.memory_space<vmem>>, vector<128x4xbf16>
    %cst_62 = arith.constant dense<0.000000e+00> : vector<64x4xf32>
    %139 = tpu.matmul %135, %138, %cst_62 {dimension_numbers = #tpu.dot_dimension_numbers<[1], [0], [0], [1], [0, 0, 1, 1], [], []>} : vector<64x128xbf16>, vector<128x4xbf16>, vector<64x4xf32> -> vector<64x4xf32>
    %cst_63 = arith.constant 0.000000e+00 : f32
    %140 = vector.broadcast %cst_63 : f32 to vector<64x32xf32>
    %141 = vector.extract_strided_slice %139 {offsets = [0, 0], sizes = [64, 1], strides = [1, 1]} : vector<64x4xf32> to vector<64x1xf32>
    %142 = vector.extract_strided_slice %137 {offsets = [0, 0], sizes = [64, 1], strides = [1, 1]} : vector<64x4xf32> to vector<64x1xf32>
    %143 = tpu.transpose %142, [1, 0] : vector<64x1xf32> -> vector<1x64xf32>
    %144 = vector.broadcast %141 : vector<64x1xf32> to vector<64x64xf32>
    %145 = vector.broadcast %143 : vector<1x64xf32> to vector<64x64xf32>
    %146 = arith.addf %144, %145 : vector<64x64xf32>
    %cst_64 = arith.constant 0.000000e+00 : f32
    %147 = vector.broadcast %cst_64 : f32 to vector<64x64xf32>
    %148 = arith.cmpf ogt, %146, %147 : vector<64x64xf32>
    %cst_65 = arith.constant 2.000000e-01 : f32
    %149 = vector.broadcast %cst_65 : f32 to vector<64x64xf32>
    %150 = arith.mulf %149, %146 : vector<64x64xf32>
    %151 = arith.select %148, %146, %150 : vector<64x64xi1>, vector<64x64xf32>
    %cst_66 = arith.constant -1.000000e+30 : f32
    %152 = vector.broadcast %cst_66 : f32 to vector<64x64xf32>
    %153 = arith.select %28, %151, %152 : vector<64x64xi1>, vector<64x64xf32>
    %cst_67 = arith.constant dense<0xFF800000> : vector<64xf32>
    %154 = vector.multi_reduction <maximumf>, %153, %cst_67 [1] : vector<64x64xf32> to vector<64xf32>
    %155 = vector.shape_cast %154 : vector<64xf32> to vector<64x1xf32>
    %156 = vector.broadcast %155 : vector<64x1xf32> to vector<64x64xf32>
    %157 = arith.subf %153, %156 : vector<64x64xf32>
    %158 = math.exp %157 : vector<64x64xf32>
    %cst_68 = arith.constant dense<0.000000e+00> : vector<64xf32>
    %159 = vector.multi_reduction <add>, %158, %cst_68 [1] : vector<64x64xf32> to vector<64xf32>
    %160 = vector.shape_cast %159 : vector<64xf32> to vector<64x1xf32>
    %161 = tpu.reciprocal %160 {approx = true} : vector<64x1xf32> -> vector<64x1xf32>
    %162 = vector.broadcast %161 : vector<64x1xf32> to vector<64x64xf32>
    %163 = arith.mulf %158, %162 : vector<64x64xf32>
    %164 = vector.extract_strided_slice %135 {offsets = [0, 0], sizes = [64, 32], strides = [1, 1]} : vector<64x128xbf16> to vector<64x32xbf16>
    %165 = arith.truncf %163 : vector<64x64xf32> to vector<64x64xbf16>
    %cst_69 = arith.constant dense<0.000000e+00> : vector<64x32xf32>
    %166 = tpu.matmul %165, %164, %cst_69 {dimension_numbers = #tpu.dot_dimension_numbers<[1], [0], [0], [1], [0, 0, 1, 1], [], []>} : vector<64x64xbf16>, vector<64x32xbf16>, vector<64x32xf32> -> vector<64x32xf32>
    %167 = arith.addf %140, %166 : vector<64x32xf32>
    %168 = vector.extract_strided_slice %139 {offsets = [0, 1], sizes = [64, 1], strides = [1, 1]} : vector<64x4xf32> to vector<64x1xf32>
    %169 = vector.extract_strided_slice %137 {offsets = [0, 1], sizes = [64, 1], strides = [1, 1]} : vector<64x4xf32> to vector<64x1xf32>
    %170 = tpu.transpose %169, [1, 0] : vector<64x1xf32> -> vector<1x64xf32>
    %171 = vector.broadcast %168 : vector<64x1xf32> to vector<64x64xf32>
    %172 = vector.broadcast %170 : vector<1x64xf32> to vector<64x64xf32>
    %173 = arith.addf %171, %172 : vector<64x64xf32>
    %cst_70 = arith.constant 0.000000e+00 : f32
    %174 = vector.broadcast %cst_70 : f32 to vector<64x64xf32>
    %175 = arith.cmpf ogt, %173, %174 : vector<64x64xf32>
    %cst_71 = arith.constant 2.000000e-01 : f32
    %176 = vector.broadcast %cst_71 : f32 to vector<64x64xf32>
    %177 = arith.mulf %176, %173 : vector<64x64xf32>
    %178 = arith.select %175, %173, %177 : vector<64x64xi1>, vector<64x64xf32>
    %cst_72 = arith.constant -1.000000e+30 : f32
    %179 = vector.broadcast %cst_72 : f32 to vector<64x64xf32>
    %180 = arith.select %28, %178, %179 : vector<64x64xi1>, vector<64x64xf32>
    %cst_73 = arith.constant dense<0xFF800000> : vector<64xf32>
    %181 = vector.multi_reduction <maximumf>, %180, %cst_73 [1] : vector<64x64xf32> to vector<64xf32>
    %182 = vector.shape_cast %181 : vector<64xf32> to vector<64x1xf32>
    %183 = vector.broadcast %182 : vector<64x1xf32> to vector<64x64xf32>
    %184 = arith.subf %180, %183 : vector<64x64xf32>
    %185 = math.exp %184 : vector<64x64xf32>
    %cst_74 = arith.constant dense<0.000000e+00> : vector<64xf32>
    %186 = vector.multi_reduction <add>, %185, %cst_74 [1] : vector<64x64xf32> to vector<64xf32>
    %187 = vector.shape_cast %186 : vector<64xf32> to vector<64x1xf32>
    %188 = tpu.reciprocal %187 {approx = true} : vector<64x1xf32> -> vector<64x1xf32>
    %189 = vector.broadcast %188 : vector<64x1xf32> to vector<64x64xf32>
    %190 = arith.mulf %185, %189 : vector<64x64xf32>
    %191 = vector.extract_strided_slice %135 {offsets = [0, 32], sizes = [64, 32], strides = [1, 1]} : vector<64x128xbf16> to vector<64x32xbf16>
    %192 = arith.truncf %190 : vector<64x64xf32> to vector<64x64xbf16>
    %cst_75 = arith.constant dense<0.000000e+00> : vector<64x32xf32>
    %193 = tpu.matmul %192, %191, %cst_75 {dimension_numbers = #tpu.dot_dimension_numbers<[1], [0], [0], [1], [0, 0, 1, 1], [], []>} : vector<64x64xbf16>, vector<64x32xbf16>, vector<64x32xf32> -> vector<64x32xf32>
    %194 = arith.addf %167, %193 : vector<64x32xf32>
    %195 = vector.extract_strided_slice %139 {offsets = [0, 2], sizes = [64, 1], strides = [1, 1]} : vector<64x4xf32> to vector<64x1xf32>
    %196 = vector.extract_strided_slice %137 {offsets = [0, 2], sizes = [64, 1], strides = [1, 1]} : vector<64x4xf32> to vector<64x1xf32>
    %197 = tpu.transpose %196, [1, 0] : vector<64x1xf32> -> vector<1x64xf32>
    %198 = vector.broadcast %195 : vector<64x1xf32> to vector<64x64xf32>
    %199 = vector.broadcast %197 : vector<1x64xf32> to vector<64x64xf32>
    %200 = arith.addf %198, %199 : vector<64x64xf32>
    %cst_76 = arith.constant 0.000000e+00 : f32
    %201 = vector.broadcast %cst_76 : f32 to vector<64x64xf32>
    %202 = arith.cmpf ogt, %200, %201 : vector<64x64xf32>
    %cst_77 = arith.constant 2.000000e-01 : f32
    %203 = vector.broadcast %cst_77 : f32 to vector<64x64xf32>
    %204 = arith.mulf %203, %200 : vector<64x64xf32>
    %205 = arith.select %202, %200, %204 : vector<64x64xi1>, vector<64x64xf32>
    %cst_78 = arith.constant -1.000000e+30 : f32
    %206 = vector.broadcast %cst_78 : f32 to vector<64x64xf32>
    %207 = arith.select %28, %205, %206 : vector<64x64xi1>, vector<64x64xf32>
    %cst_79 = arith.constant dense<0xFF800000> : vector<64xf32>
    %208 = vector.multi_reduction <maximumf>, %207, %cst_79 [1] : vector<64x64xf32> to vector<64xf32>
    %209 = vector.shape_cast %208 : vector<64xf32> to vector<64x1xf32>
    %210 = vector.broadcast %209 : vector<64x1xf32> to vector<64x64xf32>
    %211 = arith.subf %207, %210 : vector<64x64xf32>
    %212 = math.exp %211 : vector<64x64xf32>
    %cst_80 = arith.constant dense<0.000000e+00> : vector<64xf32>
    %213 = vector.multi_reduction <add>, %212, %cst_80 [1] : vector<64x64xf32> to vector<64xf32>
    %214 = vector.shape_cast %213 : vector<64xf32> to vector<64x1xf32>
    %215 = tpu.reciprocal %214 {approx = true} : vector<64x1xf32> -> vector<64x1xf32>
    %216 = vector.broadcast %215 : vector<64x1xf32> to vector<64x64xf32>
    %217 = arith.mulf %212, %216 : vector<64x64xf32>
    %218 = vector.extract_strided_slice %135 {offsets = [0, 64], sizes = [64, 32], strides = [1, 1]} : vector<64x128xbf16> to vector<64x32xbf16>
    %219 = arith.truncf %217 : vector<64x64xf32> to vector<64x64xbf16>
    %cst_81 = arith.constant dense<0.000000e+00> : vector<64x32xf32>
    %220 = tpu.matmul %219, %218, %cst_81 {dimension_numbers = #tpu.dot_dimension_numbers<[1], [0], [0], [1], [0, 0, 1, 1], [], []>} : vector<64x64xbf16>, vector<64x32xbf16>, vector<64x32xf32> -> vector<64x32xf32>
    %221 = arith.addf %194, %220 : vector<64x32xf32>
    %222 = vector.extract_strided_slice %139 {offsets = [0, 3], sizes = [64, 1], strides = [1, 1]} : vector<64x4xf32> to vector<64x1xf32>
    %223 = vector.extract_strided_slice %137 {offsets = [0, 3], sizes = [64, 1], strides = [1, 1]} : vector<64x4xf32> to vector<64x1xf32>
    %224 = tpu.transpose %223, [1, 0] : vector<64x1xf32> -> vector<1x64xf32>
    %225 = vector.broadcast %222 : vector<64x1xf32> to vector<64x64xf32>
    %226 = vector.broadcast %224 : vector<1x64xf32> to vector<64x64xf32>
    %227 = arith.addf %225, %226 : vector<64x64xf32>
    %cst_82 = arith.constant 0.000000e+00 : f32
    %228 = vector.broadcast %cst_82 : f32 to vector<64x64xf32>
    %229 = arith.cmpf ogt, %227, %228 : vector<64x64xf32>
    %cst_83 = arith.constant 2.000000e-01 : f32
    %230 = vector.broadcast %cst_83 : f32 to vector<64x64xf32>
    %231 = arith.mulf %230, %227 : vector<64x64xf32>
    %232 = arith.select %229, %227, %231 : vector<64x64xi1>, vector<64x64xf32>
    %cst_84 = arith.constant -1.000000e+30 : f32
    %233 = vector.broadcast %cst_84 : f32 to vector<64x64xf32>
    %234 = arith.select %28, %232, %233 : vector<64x64xi1>, vector<64x64xf32>
    %cst_85 = arith.constant dense<0xFF800000> : vector<64xf32>
    %235 = vector.multi_reduction <maximumf>, %234, %cst_85 [1] : vector<64x64xf32> to vector<64xf32>
    %236 = vector.shape_cast %235 : vector<64xf32> to vector<64x1xf32>
    %237 = vector.broadcast %236 : vector<64x1xf32> to vector<64x64xf32>
    %238 = arith.subf %234, %237 : vector<64x64xf32>
    %239 = math.exp %238 : vector<64x64xf32>
    %cst_86 = arith.constant dense<0.000000e+00> : vector<64xf32>
    %240 = vector.multi_reduction <add>, %239, %cst_86 [1] : vector<64x64xf32> to vector<64xf32>
    %241 = vector.shape_cast %240 : vector<64xf32> to vector<64x1xf32>
    %242 = tpu.reciprocal %241 {approx = true} : vector<64x1xf32> -> vector<64x1xf32>
    %243 = vector.broadcast %242 : vector<64x1xf32> to vector<64x64xf32>
    %244 = arith.mulf %239, %243 : vector<64x64xf32>
    %245 = vector.extract_strided_slice %135 {offsets = [0, 96], sizes = [64, 32], strides = [1, 1]} : vector<64x128xbf16> to vector<64x32xbf16>
    %246 = arith.truncf %244 : vector<64x64xf32> to vector<64x64xbf16>
    %cst_87 = arith.constant dense<0.000000e+00> : vector<64x32xf32>
    %247 = tpu.matmul %246, %245, %cst_87 {dimension_numbers = #tpu.dot_dimension_numbers<[1], [0], [0], [1], [0, 0, 1, 1], [], []>} : vector<64x64xbf16>, vector<64x32xbf16>, vector<64x32xf32> -> vector<64x32xf32>
    %248 = arith.addf %221, %247 : vector<64x32xf32>
    %cst_88 = arith.constant 2.500000e-01 : f32
    %249 = vector.broadcast %cst_88 : f32 to vector<64x32xf32>
    %250 = arith.mulf %248, %249 : vector<64x32xf32>
    %c0_89 = arith.constant 0 : index
    %c0_90 = arith.constant 0 : index
    %251 = vector.load %arg18[%c0_89, %c0_90] : memref<1x32xf32, #tpu.memory_space<vmem>>, vector<1x32xf32>
    %252 = vector.broadcast %251 : vector<1x32xf32> to vector<64x32xf32>
    %253 = arith.addf %250, %252 : vector<64x32xf32>
    %cst_91 = arith.constant dense<0.000000e+00> : vector<32xf32>
    %254 = vector.multi_reduction <add>, %253, %cst_91 [0] : vector<64x32xf32> to vector<32xf32>
    %255 = vector.shape_cast %254 : vector<32xf32> to vector<1x32xf32>
    %cst_92 = arith.constant 6.400000e+01 : f32
    %256 = vector.broadcast %cst_92 : f32 to vector<1x32xf32>
    %257 = arith.divf %255, %256 : vector<1x32xf32>
    %258 = vector.broadcast %257 : vector<1x32xf32> to vector<64x32xf32>
    %259 = arith.subf %253, %258 : vector<64x32xf32>
    %260 = arith.mulf %259, %259 : vector<64x32xf32>
    %cst_93 = arith.constant dense<0.000000e+00> : vector<32xf32>
    %261 = vector.multi_reduction <add>, %260, %cst_93 [0] : vector<64x32xf32> to vector<32xf32>
    %262 = vector.shape_cast %261 : vector<32xf32> to vector<1x32xf32>
    %cst_94 = arith.constant 6.400000e+01 : f32
    %263 = vector.broadcast %cst_94 : f32 to vector<1x32xf32>
    %264 = arith.divf %262, %263 : vector<1x32xf32>
    %265 = vector.broadcast %257 : vector<1x32xf32> to vector<64x32xf32>
    %266 = arith.subf %253, %265 : vector<64x32xf32>
    %cst_95 = arith.constant 9.99999974E-6 : f32
    %267 = vector.broadcast %cst_95 : f32 to vector<1x32xf32>
    %268 = arith.addf %264, %267 : vector<1x32xf32>
    %269 = math.rsqrt %268 : vector<1x32xf32>
    %270 = vector.broadcast %269 : vector<1x32xf32> to vector<64x32xf32>
    %271 = arith.mulf %266, %270 : vector<64x32xf32>
    %c0_96 = arith.constant 0 : index
    %c0_97 = arith.constant 0 : index
    %272 = vector.load %arg19[%c0_96, %c0_97] : memref<1x32xf32, #tpu.memory_space<vmem>>, vector<1x32xf32>
    %273 = vector.broadcast %272 : vector<1x32xf32> to vector<64x32xf32>
    %274 = arith.mulf %271, %273 : vector<64x32xf32>
    %c0_98 = arith.constant 0 : index
    %c0_99 = arith.constant 0 : index
    %275 = vector.load %arg20[%c0_98, %c0_99] : memref<1x32xf32, #tpu.memory_space<vmem>>, vector<1x32xf32>
    %276 = vector.broadcast %275 : vector<1x32xf32> to vector<64x32xf32>
    %277 = arith.addf %274, %276 : vector<64x32xf32>
    %cst_100 = arith.constant 0.000000e+00 : f32
    %278 = vector.broadcast %cst_100 : f32 to vector<64x32xf32>
    %279 = arith.maximumf %277, %278 : vector<64x32xf32>
    %280 = tpu.iota {dimensions = array<i32: 0>} : vector<2x64xi32>
    %c0_101 = arith.constant 0 : index
    %c0_102 = arith.constant 0 : index
    %281 = vector.load %arg1[%c0_101, %c0_102] : memref<1x64xi32, #tpu.memory_space<vmem>>, vector<1x64xi32>
    %282 = vector.broadcast %281 : vector<1x64xi32> to vector<2x64xi32>
    %283 = arith.cmpi eq, %280, %282 : vector<2x64xi32>
    %284 = arith.extui %283 : vector<2x64xi1> to vector<2x64xi32>
    %285 = arith.sitofp %284 : vector<2x64xi32> to vector<2x64xf32>
    %cst_103 = arith.constant dense<0.000000e+00> : vector<2xf32>
    %286 = vector.multi_reduction <add>, %285, %cst_103 [1] : vector<2x64xf32> to vector<2xf32>
    %287 = vector.shape_cast %286 : vector<2xf32> to vector<2x1xf32>
    %cst_104 = arith.constant 1.000000e+00 : f32
    %288 = vector.broadcast %cst_104 : f32 to vector<2x1xf32>
    %289 = arith.maximumf %287, %288 : vector<2x1xf32>
    %290 = vector.broadcast %289 : vector<2x1xf32> to vector<2x64xf32>
    %291 = arith.divf %285, %290 : vector<2x64xf32>
    %cst_105 = arith.constant dense<0.000000e+00> : vector<2x32xf32>
    %292 = tpu.matmul %291, %279, %cst_105 {dimension_numbers = #tpu.dot_dimension_numbers<[1], [0], [0], [1], [0, 0, 1, 1], [], []>} : vector<2x64xf32>, vector<64x32xf32>, vector<2x32xf32> -> vector<2x32xf32>
    %293 = arith.truncf %292 : vector<2x32xf32> to vector<2x32xbf16>
    %c0_106 = arith.constant 0 : index
    %c0_107 = arith.constant 0 : index
    %294 = vector.load %arg21[%c0_106, %c0_107] : memref<32x512xbf16, #tpu.memory_space<vmem>>, vector<32x512xbf16>
    %cst_108 = arith.constant dense<0.000000e+00> : vector<2x512xf32>
    %295 = tpu.matmul %293, %294, %cst_108 {dimension_numbers = #tpu.dot_dimension_numbers<[1], [0], [0], [1], [0, 0, 1, 1], [], []>} : vector<2x32xbf16>, vector<32x512xbf16>, vector<2x512xf32> -> vector<2x512xf32>
    %c0_109 = arith.constant 0 : index
    %c0_110 = arith.constant 0 : index
    %296 = vector.load %arg22[%c0_109, %c0_110] : memref<1x512xf32, #tpu.memory_space<vmem>>, vector<1x512xf32>
    %297 = vector.broadcast %296 : vector<1x512xf32> to vector<2x512xf32>
    %298 = arith.addf %295, %297 : vector<2x512xf32>
    %cst_111 = arith.constant 0.000000e+00 : f32
    %299 = vector.broadcast %cst_111 : f32 to vector<2x512xf32>
    %300 = arith.maximumf %298, %299 : vector<2x512xf32>
    %c0_112 = arith.constant 0 : index
    %c0_113 = arith.constant 0 : index
    %301 = vector.load %arg23[%c0_112, %c0_113] : memref<2x512xf32, #tpu.memory_space<vmem>>, vector<2x512xf32>
    tpu.vector_store %arg23[%c0_112, %c0_113], %300 {strides = array<i32>} : memref<2x512xf32, #tpu.memory_space<vmem>>, vector<2x512xf32>,
    return
  }
}

</mosaic_0001>

<llo_original>
// kernel: gcn_forward.1
$region0: #{gcn_forward.1}
  #allocation0 [shape = 'u32[]', space=smem, size = 0x4, offset = 0x4, fixed_abs, tag = 'smem constant byte address 0x4 - core index']
  #allocation1 [shape = 'u32[72,128]{1,0:T(1,128)}', space=vmem, size = 0x9000, scoped, tag = 'internal scratch']
  %s0 = inlined_call_operand.vmem [shape: s32[2,128], index: 0, kind: input, shape index: {}]
  %s1 = inlined_call_operand.vmem [shape: s32[1,64], index: 1, kind: input, shape index: {}]
  %s2 = inlined_call_operand.vmem [shape: f32[64,8], index: 2, kind: input, shape index: {}]
  %s3 = inlined_call_operand.vmem [shape: bf16[8,16], index: 3, kind: input, shape index: {}]
  %s4 = inlined_call_operand.vmem [shape: f32[1,16], index: 4, kind: input, shape index: {}]
  %s5 = inlined_call_operand.vmem [shape: f32[1,16], index: 5, kind: input, shape index: {}]
  %s6 = inlined_call_operand.vmem [shape: f32[1,16], index: 6, kind: input, shape index: {}]
  %s7 = inlined_call_operand.vmem [shape: bf16[16,32], index: 7, kind: input, shape index: {}]
  %s8 = inlined_call_operand.vmem [shape: f32[1,32], index: 8, kind: input, shape index: {}]
  %s9 = inlined_call_operand.vmem [shape: f32[1,32], index: 9, kind: input, shape index: {}]
  %s10 = inlined_call_operand.vmem [shape: f32[1,32], index: 10, kind: input, shape index: {}]
  %s11 = inlined_call_operand.vmem [shape: bf16[32,32], index: 11, kind: input, shape index: {}]
  %s12 = inlined_call_operand.vmem [shape: f32[1,32], index: 12, kind: input, shape index: {}]
  %s13 = inlined_call_operand.vmem [shape: f32[1,32], index: 13, kind: input, shape index: {}]
  %s14 = inlined_call_operand.vmem [shape: f32[1,32], index: 14, kind: input, shape index: {}]
  %s15 = inlined_call_operand.vmem [shape: bf16[32,128], index: 15, kind: input, shape index: {}]
  %s16 = inlined_call_operand.vmem [shape: bf16[128,4], index: 16, kind: input, shape index: {}]
  %s17 = inlined_call_operand.vmem [shape: bf16[128,4], index: 17, kind: input, shape index: {}]
  %s18 = inlined_call_operand.vmem [shape: f32[1,32], index: 18, kind: input, shape index: {}]
  %s19 = inlined_call_operand.vmem [shape: f32[1,32], index: 19, kind: input, shape index: {}]
  %s20 = inlined_call_operand.vmem [shape: f32[1,32], index: 20, kind: input, shape index: {}]
  %s21 = inlined_call_operand.vmem [shape: bf16[32,512], index: 21, kind: input, shape index: {}]
  %s22 = inlined_call_operand.vmem [shape: f32[1,512], index: 22, kind: input, shape index: {}]
  %s23 = inlined_call_operand.hbm [shape: f32[2,512], index: 23, kind: output, shape index: {}]
  %s24 = sld [smem:[#allocation0]]
  $region102: #{gcn_forward.1} parent=0
    _
  %s26 = ssub.s32 1, %s24
  %s27 = scalar_select 0, %s26, %s24
  $region1: #{gcn_forward.1} parent=0
    #allocation2 [shape = 'u8[4096]{0}', space=vmem, size = 0x1000, scoped, tag = 'output window, operand 0, single buffered']
    #allocation3 [shape = 's32[1]{0}', space=sflag, size = 0x4, scoped, tag = 'scoped memory for gcn_forward.1']
    %28 = vsyncpa [#allocation3], 0
    // Predicated region
    $region2: #{gcn_forward.1} parent=1 // pred_check
      _
    $region3: #{gcn_forward.1} parent=1 // pred_check_branch
      %30 = sbr.rel (0) target = $region5
    $region4: #{gcn_forward.1} parent=1 // pred_region
      _
    $region5: #{gcn_forward.1} parent=1 // pred_fallthru
      _
    // Predicated region
    $region6: #{gcn_forward.1} parent=1 // pred_check
      _
    $region7: #{gcn_forward.1} parent=1 // pred_check_branch
      %32 = sbr.rel (0) target = $region9
    $region8: #{gcn_forward.1} parent=1 // pred_region
      _
    $region9: #{gcn_forward.1} parent=1 // pred_fallthru
      _
    // Predicated region
    $region10: #{gcn_forward.1} parent=1 // pred_check
      _
    $region11: #{gcn_forward.1} parent=1 // pred_check_branch
      %34 = sbr.rel (0) target = $region13
    $region12: #{gcn_forward.1} parent=1 // pred_region
      _
    $region13: #{gcn_forward.1} parent=1 // pred_fallthru
      _
    // Predicated region
    $region14: #{gcn_forward.1} parent=1 // pred_check
      _
    $region15: #{gcn_forward.1} parent=1 // pred_check_branch
      %36 = sbr.rel (0) target = $region17
    $region16: #{gcn_forward.1} parent=1 // pred_region
      _
    $region17: #{gcn_forward.1} parent=1 // pred_fallthru
      _
    // Predicated region
    $region18: #{gcn_forward.1} parent=1 // pred_check
      _
    $region19: #{gcn_forward.1} parent=1 // pred_check_branch
      %38 = sbr.rel (0) target = $region21
    $region20: #{gcn_forward.1} parent=1 // pred_region
      _
    $region21: #{gcn_forward.1} parent=1 // pred_fallthru
      _
    // Predicated region
    $region22: #{gcn_forward.1} parent=1 // pred_check
      _
    $region23: #{gcn_forward.1} parent=1 // pred_check_branch
      %40 = sbr.rel (0) target = $region25
    $region24: #{gcn_forward.1} parent=1 // pred_region
      _
    $region25: #{gcn_forward.1} parent=1 // pred_fallthru
      _
    // Predicated region
    $region26: #{gcn_forward.1} parent=1 // pred_check
      _
    $region27: #{gcn_forward.1} parent=1 // pred_check_branch
      %42 = sbr.rel (0) target = $region29
    $region28: #{gcn_forward.1} parent=1 // pred_region
      _
    $region29: #{gcn_forward.1} parent=1 // pred_fallthru
      _
    // Predicated region
    $region30: #{gcn_forward.1} parent=1 // pred_check
      _
    $region31: #{gcn_forward.1} parent=1 // pred_check_branch
      %44 = sbr.rel (0) target = $region33
    $region32: #{gcn_forward.1} parent=1 // pred_region
      _
    $region33: #{gcn_forward.1} parent=1 // pred_fallthru
      _
    // Predicated region
    $region34: #{gcn_forward.1} parent=1 // pred_check
      _
    $region35: #{gcn_forward.1} parent=1 // pred_check_branch
      %46 = sbr.rel (0) target = $region37
    $region36: #{gcn_forward.1} parent=1 // pred_region
      _
    $region37: #{gcn_forward.1} parent=1 // pred_fallthru
      _
    // Predicated region
    $region38: #{gcn_forward.1} parent=1 // pred_check
      _
    $region39: #{gcn_forward.1} parent=1 // pred_check_branch
      %48 = sbr.rel (0) target = $region41
    $region40: #{gcn_forward.1} parent=1 // pred_region
      _
    $region41: #{gcn_forward.1} parent=1 // pred_fallthru
      _
    // Predicated region
    $region42: #{gcn_forward.1} parent=1 // pred_check
      _
    $region43: #{gcn_forward.1} parent=1 // pred_check_branch
      %50 = sbr.rel (0) target = $region45
    $region44: #{gcn_forward.1} parent=1 // pred_region
      _
    $region45: #{gcn_forward.1} parent=1 // pred_fallthru
      _
    // Predicated region
    $region46: #{gcn_forward.1} parent=1 // pred_check
      _
    $region47: #{gcn_forward.1} parent=1 // pred_check_branch
      %52 = sbr.rel (0) target = $region49
    $region48: #{gcn_forward.1} parent=1 // pred_region
      _
    $region49: #{gcn_forward.1} parent=1 // pred_fallthru
      _
    // Predicated region
    $region50: #{gcn_forward.1} parent=1 // pred_check
      _
    $region51: #{gcn_forward.1} parent=1 // pred_check_branch
      %54 = sbr.rel (0) target = $region53
    $region52: #{gcn_forward.1} parent=1 // pred_region
      _
    $region53: #{gcn_forward.1} parent=1 // pred_fallthru
      _
    // Predicated region
    $region54: #{gcn_forward.1} parent=1 // pred_check
      _
    $region55: #{gcn_forward.1} parent=1 // pred_check_branch
      %56 = sbr.rel (0) target = $region57
    $region56: #{gcn_forward.1} parent=1 // pred_region
      _
    $region57: #{gcn_forward.1} parent=1 // pred_fallthru
      _
    // Predicated region
    $region58: #{gcn_forward.1} parent=1 // pred_check
      _
    $region59: #{gcn_forward.1} parent=1 // pred_check_branch
      %58 = sbr.rel (0) target = $region61
    $region60: #{gcn_forward.1} parent=1 // pred_region
      _
    $region61: #{gcn_forward.1} parent=1 // pred_fallthru
      _
    // Predicated region
    $region62: #{gcn_forward.1} parent=1 // pred_check
      _
    $region63: #{gcn_forward.1} parent=1 // pred_check_branch
      %60 = sbr.rel (0) target = $region65
    $region64: #{gcn_forward.1} parent=1 // pred_region
      _
    $region65: #{gcn_forward.1} parent=1 // pred_fallthru
      _
    // Predicated region
    $region66: #{gcn_forward.1} parent=1 // pred_check
      _
    $region67: #{gcn_forward.1} parent=1 // pred_check_branch
      %62 = sbr.rel (0) target = $region69
    $region68: #{gcn_forward.1} parent=1 // pred_region
      _
    $region69: #{gcn_forward.1} parent=1 // pred_fallthru
      _
    // Predicated region
    $region70: #{gcn_forward.1} parent=1 // pred_check
      _
    $region71: #{gcn_forward.1} parent=1 // pred_check_branch
      %64 = sbr.rel (0) target = $region73
    $region72: #{gcn_forward.1} parent=1 // pred_region
      _
    $region73: #{gcn_forward.1} parent=1 // pred_fallthru
      _
    // Predicated region
    $region74: #{gcn_forward.1} parent=1 // pred_check
      _
    $region75: #{gcn_forward.1} parent=1 // pred_check_branch
      %66 = sbr.rel (0) target = $region77
    $region76: #{gcn_forward.1} parent=1 // pred_region
      _
    $region77: #{gcn_forward.1} parent=1 // pred_fallthru
      _
    // Predicated region
    $region78: #{gcn_forward.1} parent=1 // pred_check
      _
    $region79: #{gcn_forward.1} parent=1 // pred_check_branch
      %68 = sbr.rel (0) target = $region81
    $region80: #{gcn_forward.1} parent=1 // pred_region
      _
    $region81: #{gcn_forward.1} parent=1 // pred_fallthru
      _
    // Predicated region
    $region82: #{gcn_forward.1} parent=1 // pred_check
      _
    $region83: #{gcn_forward.1} parent=1 // pred_check_branch
      %70 = sbr.rel (0) target = $region85
    $region84: #{gcn_forward.1} parent=1 // pred_region
      _
    $region85: #{gcn_forward.1} parent=1 // pred_fallthru
      _
    // Predicated region
    $region86: #{gcn_forward.1} parent=1 // pred_check
      _
    $region87: #{gcn_forward.1} parent=1 // pred_check_branch
      %72 = sbr.rel (0) target = $region89
    $region88: #{gcn_forward.1} parent=1 // pred_region
      _
    $region89: #{gcn_forward.1} parent=1 // pred_fallthru
      _
    // Predicated region
    $region90: #{gcn_forward.1} parent=1 // pred_check
      _
    $region91: #{gcn_forward.1} parent=1 // pred_check_branch
      %74 = sbr.rel (0) target = $region93
    $region92: #{gcn_forward.1} parent=1 // pred_region
      _
    $region93: #{gcn_forward.1} parent=1 // pred_fallthru
      _
    %v76 = vlaneseq
    %v77 = vshrl.u32 %v76, 7
    %v78 = vadd.s32 %v77, 8
    %v79 = vadd.s32 %v77, 16
    %v80 = vadd.s32 %v77, 24
    %v81 = vadd.s32 %v77, 32
    %v82 = vadd.s32 %v77, 40
    %v83 = vadd.s32 %v77, 48
    %v84 = vadd.s32 %v77, 56
    %v85 = vld [vmem:[%s0] sm:$0x1]
    %v86 = vld [vmem:[%s0 + $0x1] sm:$0x1]
    %v87 = vperm.slane %v86, 0
    %vm88 = vcmp.eq.s32.totalorder %v77, %v87
    %vm89 = vcmp.eq.s32.totalorder %v78, %v87
    %vm90 = vcmp.eq.s32.totalorder %v79, %v87
    %vm91 = vcmp.eq.s32.totalorder %v80, %v87
    %vm92 = vcmp.eq.s32.totalorder %v81, %v87
    %vm93 = vcmp.eq.s32.totalorder %v82, %v87
    %vm94 = vcmp.eq.s32.totalorder %v83, %v87
    %vm95 = vcmp.eq.s32.totalorder %v84, %v87
    %v96 = vsel %vm88, 1, 0
    %v97 = vsel %vm89, 1, 0
    %v98 = vsel %vm90, 1, 0
    %v99 = vsel %vm91, 1, 0
    %v100 = vsel %vm92, 1, 0
    %v101 = vsel %vm93, 1, 0
    %v102 = vsel %vm94, 1, 0
    %v103 = vsel %vm95, 1, 0
    %v104 = vcvt.s32.f32 %v96
    %v105 = vcvt.s32.f32 %v97
    %v106 = vcvt.s32.f32 %v98
    %v107 = vcvt.s32.f32 %v99
    %v108 = vcvt.s32.f32 %v100
    %v109 = vcvt.s32.f32 %v101
    %v110 = vcvt.s32.f32 %v102
    %v111 = vcvt.s32.f32 %v103
    %v112 = vperm.slane %v85, 0
    %vm113 = vcmp.eq.s32.totalorder %v77, %v112
    %vm114 = vcmp.eq.s32.totalorder %v78, %v112
    %vm115 = vcmp.eq.s32.totalorder %v79, %v112
    %vm116 = vcmp.eq.s32.totalorder %v80, %v112
    %vm117 = vcmp.eq.s32.totalorder %v81, %v112
    %vm118 = vcmp.eq.s32.totalorder %v82, %v112
    %vm119 = vcmp.eq.s32.totalorder %v83, %v112
    %vm120 = vcmp.eq.s32.totalorder %v84, %v112
    %v121 = vsel %vm113, 1, 0
    %v122 = vsel %vm114, 1, 0
    %v123 = vsel %vm115, 1, 0
    %v124 = vsel %vm116, 1, 0
    %v125 = vsel %vm117, 1, 0
    %v126 = vsel %vm118, 1, 0
    %v127 = vsel %vm119, 1, 0
    %v128 = vsel %vm120, 1, 0
    %v129 = vcvt.s32.f32 %v121
    %v130 = vcvt.s32.f32 %v122
    %v131 = vcvt.s32.f32 %v123
    %v132 = vcvt.s32.f32 %v124
    %v133 = vcvt.s32.f32 %v125
    %v134 = vcvt.s32.f32 %v126
    %v135 = vcvt.s32.f32 %v127
    %v136 = vcvt.s32.f32 %v128
    %v137 = vlaneseq
    %v138 = vand.u32 %v137, 127
    %vm139 = vcmp.eq.s32.totalorder %v77, %v138
    %vm140 = vcmp.eq.s32.totalorder %v78, %v138
    %vm141 = vcmp.eq.s32.totalorder %v79, %v138
    %vm142 = vcmp.eq.s32.totalorder %v80, %v138
    %vm143 = vcmp.eq.s32.totalorder %v81, %v138
    %vm144 = vcmp.eq.s32.totalorder %v82, %v138
    %vm145 = vcmp.eq.s32.totalorder %v83, %v138
    %vm146 = vcmp.eq.s32.totalorder %v84, %v138
    %v147 = vsel %vm139, 1, 0
    %v148 = vsel %vm140, 1, 0
    %v149 = vsel %vm141, 1, 0
    %v150 = vsel %vm142, 1, 0
    %v151 = vsel %vm143, 1, 0
    %v152 = vsel %vm144, 1, 0
    %v153 = vsel %vm145, 1, 0
    %v154 = vsel %vm146, 1, 0
    %v155 = vcvt.s32.f32 %v147
    %v156 = vcvt.s32.f32 %v148
    %v157 = vcvt.s32.f32 %v149
    %v158 = vcvt.s32.f32 %v150
    %v159 = vcvt.s32.f32 %v151
    %v160 = vcvt.s32.f32 %v152
    %v161 = vcvt.s32.f32 %v153
    %v162 = vcvt.s32.f32 %v154
    %163 = vmatpush.xpose.msra.mxu0 0.0
    %164 = vmatpush.xpose.msra.mxu0 0.0
    %165 = vmatpush.xpose.msra.mxu0 0.0
    %166 = vmatpush.xpose.msra.mxu0 0.0
    %167 = vmatpush.xpose.msra.mxu0 0.0
    %168 = vmatpush.xpose.msra.mxu0 0.0
    %169 = vmatpush.xpose.msra.mxu0 0.0
    %170 = vmatpush.xpose.msra.mxu0 0.0
    %171 = vmatpush.xpose.msra.mxu0 %v136
    %172 = vmatpush.xpose.msra.mxu0 %v135
    %173 = vmatpush.xpose.msra.mxu0 %v134
    %174 = vmatpush.xpose.msra.mxu0 %v133
    %175 = vmatpush.xpose.msra.mxu0 %v132
    %176 = vmatpush.xpose.msra.mxu0 %v131
    %177 = vmatpush.xpose.msra.mxu0 %v130
    %178 = vmatpush.xpose.msra.mxu0 %v129
    %179 = vmatmul.f32.gmra.mxu0 %v104
    %v180 = vpop.f32.mrf.mxu0
    %v181 = vadd.f32 %v155, %v180
    %182 = vmatmul.f32.gmra.mxu0 %v105
    %v183 = vpop.f32.mrf.mxu0
    %v184 = vadd.f32 %v156, %v183
    %185 = vmatmul.f32.gmra.mxu0 %v106
    %v186 = vpop.f32.mrf.mxu0
    %v187 = vadd.f32 %v157, %v186
    %188 = vmatmul.f32.gmra.mxu0 %v107
    %v189 = vpop.f32.mrf.mxu0
    %v190 = vadd.f32 %v158, %v189
    %191 = vmatmul.f32.gmra.mxu0 %v108
    %v192 = vpop.f32.mrf.mxu0
    %v193 = vadd.f32 %v159, %v192
    %194 = vmatmul.f32.gmra.mxu0 %v109
    %v195 = vpop.f32.mrf.mxu0
    %v196 = vadd.f32 %v160, %v195
    %197 = vmatmul.f32.gmra.mxu0 %v110
    %v198 = vpop.f32.mrf.mxu0
    %v199 = vadd.f32 %v161, %v198
    %200 = vmatmul.f32.gmra.mxu0 %v111
    %v201 = vpop.f32.mrf.mxu0
    %v202 = vadd.f32 %v162, %v201
    %203 = vdwg.mxu0
    %vm204 = vcmask 523264
    %v205 = vsel %vm204, %v181, 0.0
    %206 = vadd.xlane.f32.xlu0 %v205
    %v207 = vpop.xlane.xlu0 %206
    %v208 = vsel %vm204, %v184, 0.0
    %209 = vadd.xlane.f32.xlu0 %v208
    %v210 = vpop.xlane.xlu0 %209
    %v211 = vsel %vm204, %v187, 0.0
    %212 = vadd.xlane.f32.xlu0 %v211
    %v213 = vpop.xlane.xlu0 %212
    %v214 = vsel %vm204, %v190, 0.0
    %215 = vadd.xlane.f32.xlu0 %v214
    %v216 = vpop.xlane.xlu0 %215
    %v217 = vsel %vm204, %v193, 0.0
    %218 = vadd.xlane.f32.xlu0 %v217
    %v219 = vpop.xlane.xlu0 %218
    %v220 = vsel %vm204, %v196, 0.0
    %221 = vadd.xlane.f32.xlu0 %v220
    %v222 = vpop.xlane.xlu0 %221
    %v223 = vsel %vm204, %v199, 0.0
    %224 = vadd.xlane.f32.xlu0 %v223
    %v225 = vpop.xlane.xlu0 %224
    %v226 = vsel %vm204, %v202, 0.0
    %227 = vadd.xlane.f32.xlu0 %v226
    %v228 = vpop.xlane.xlu0 %227
    %v229 = vrsqrt.pop %v207
    %v230 = vmul.f32 %v229, %v207
    %v231 = vmul.f32 %v230, %v229
    %v232 = vmul.f32 0.5, %v231
    %v233 = vsub.f32 1.5, %v232
    %v234 = vmul.f32 %v229, %v233
    %vm235 = vweird.f32 %v207
    %vm236 = vweird.f32 %v229
    %vm237 = vmor %vm235, %vm236
    %v238 = vsel %vm237, %v229, %v234
    %v239 = vrsqrt.pop %v210
    %v240 = vmul.f32 %v239, %v210
    %v241 = vmul.f32 %v240, %v239
    %v242 = vmul.f32 0.5, %v241
    %v243 = vsub.f32 1.5, %v242
    %v244 = vmul.f32 %v239, %v243
    %vm245 = vweird.f32 %v210
    %vm246 = vweird.f32 %v239
    %vm247 = vmor %vm245, %vm246
    %v248 = vsel %vm247, %v239, %v244
    %v249 = vrsqrt.pop %v213
    %v250 = vmul.f32 %v249, %v213
    %v251 = vmul.f32 %v250, %v249
    %v252 = vmul.f32 0.5, %v251
    %v253 = vsub.f32 1.5, %v252
    %v254 = vmul.f32 %v249, %v253
    %vm255 = vweird.f32 %v213
    %vm256 = vweird.f32 %v249
    %vm257 = vmor %vm255, %vm256
    %v258 = vsel %vm257, %v249, %v254
    %v259 = vrsqrt.pop %v216
    %v260 = vmul.f32 %v259, %v216
    %v261 = vmul.f32 %v260, %v259
    %v262 = vmul.f32 0.5, %v261
    %v263 = vsub.f32 1.5, %v262
    %v264 = vmul.f32 %v259, %v263
    %vm265 = vweird.f32 %v216
    %vm266 = vweird.f32 %v259
    %vm267 = vmor %vm265, %vm266
    %v268 = vsel %vm267, %v259, %v264
    %v269 = vrsqrt.pop %v219
    %v270 = vmul.f32 %v269, %v219
    %v271 = vmul.f32 %v270, %v269
    %v272 = vmul.f32 0.5, %v271
    %v273 = vsub.f32 1.5, %v272
    %v274 = vmul.f32 %v269, %v273
    %vm275 = vweird.f32 %v219
    %vm276 = vweird.f32 %v269
    %vm277 = vmor %vm275, %vm276
    %v278 = vsel %vm277, %v269, %v274
    %v279 = vrsqrt.pop %v222
    %v280 = vmul.f32 %v279, %v222
    %v281 = vmul.f32 %v280, %v279
    %v282 = vmul.f32 0.5, %v281
    %v283 = vsub.f32 1.5, %v282
    %v284 = vmul.f32 %v279, %v283
    %vm285 = vweird.f32 %v222
    %vm286 = vweird.f32 %v279
    %vm287 = vmor %vm285, %vm286
    %v288 = vsel %vm287, %v279, %v284
    %v289 = vrsqrt.pop %v225
    %v290 = vmul.f32 %v289, %v225
    %v291 = vmul.f32 %v290, %v289
    %v292 = vmul.f32 0.5, %v291
    %v293 = vsub.f32 1.5, %v292
    %v294 = vmul.f32 %v289, %v293
    %vm295 = vweird.f32 %v225
    %vm296 = vweird.f32 %v289
    %vm297 = vmor %vm295, %vm296
    %v298 = vsel %vm297, %v289, %v294
    %v299 = vrsqrt.pop %v228
    %v300 = vmul.f32 %v299, %v228
    %v301 = vmul.f32 %v300, %v299
    %v302 = vmul.f32 0.5, %v301
    %v303 = vsub.f32 1.5, %v302
    %v304 = vmul.f32 %v299, %v303
    %vm305 = vweird.f32 %v228
    %vm306 = vweird.f32 %v299
    %vm307 = vmor %vm305, %vm306
    %v308 = vsel %vm307, %v299, %v304
    %v309 = vmul.f32 %v238, %v181
    %v310 = vmul.f32 %v248, %v184
    %v311 = vmul.f32 %v258, %v187
    %v312 = vmul.f32 %v268, %v190
    %v313 = vmul.f32 %v278, %v193
    %v314 = vmul.f32 %v288, %v196
    %v315 = vmul.f32 %v298, %v199
    %v316 = vmul.f32 %v308, %v202
    %317 = vxpose.xlu0.b32.start [1/16] %v238, 128
    %318 = vxpose.xlu0.b32.cont [2/16] %v248, 128
    %319 = vxpose.xlu0.b32.cont [3/16] %v258, 128
    %320 = vxpose.xlu0.b32.cont [4/16] %v268, 128
    %321 = vxpose.xlu0.b32.cont [5/16] %v278, 128
    %322 = vxpose.xlu0.b32.cont [6/16] %v288, 128
    %323 = vxpose.xlu0.b32.cont [7/16] %v298, 128
    %324 = vxpose.xlu0.b32.cont [8/16] %v308, 128
    %325 = vxpose.xlu0.b32.cont [9/16] 0.0, 128
    %326 = vxpose.xlu0.b32.cont [10/16] 0.0, 128
    %327 = vxpose.xlu0.b32.cont [11/16] 0.0, 128
    %328 = vxpose.xlu0.b32.cont [12/16] 0.0, 128
    %329 = vxpose.xlu0.b32.cont [13/16] 0.0, 128
    %330 = vxpose.xlu0.b32.cont [14/16] 0.0, 128
    %331 = vxpose.xlu0.b32.cont [15/16] 0.0, 128
    %332 = vxpose.xlu0.b32.end [16/16] 0.0, 128
    %v333 = vpop.trf.xlu0
    %v334 = vpop.trf.xlu0
    %v335 = vpop.trf.xlu0
    %v336 = vpop.trf.xlu0
    %v337 = vpop.trf.xlu0
    %v338 = vpop.trf.xlu0
    %v339 = vpop.trf.xlu0
    %v340 = vpop.trf.xlu0
    %v341 = vpop.trf.xlu0
    %v342 = vpop.trf.xlu0
    %v343 = vpop.trf.xlu0
    %v344 = vpop.trf.xlu0
    %v345 = vpop.trf.xlu0
    %v346 = vpop.trf.xlu0
    %v347 = vpop.trf.xlu0
    %v348 = vpop.trf.xlu0
    %v349 = vperm.slane %v333, 0
    %v350 = vmul.f32 %v309, %v349
    %v351 = vmul.f32 %v310, %v349
    %v352 = vmul.f32 %v311, %v349
    %v353 = vmul.f32 %v312, %v349
    %v354 = vmul.f32 %v313, %v349
    %v355 = vmul.f32 %v314, %v349
    %v356 = vmul.f32 %v315, %v349
    %v357 = vmul.f32 %v316, %v349
    %v358 = vpack.c.bf16 %v351, %v350
    %v359 = vpack.c.bf16 %v353, %v352
    %v360 = vpack.c.bf16 %v355, %v354
    %v361 = vpack.c.bf16 %v357, %v356
    %vm362 = vcmp.gt.f32.partialorder %v181, 0.0
    %vm363 = vcmp.gt.f32.partialorder %v184, 0.0
    %vm364 = vcmp.gt.f32.partialorder %v187, 0.0
    %vm365 = vcmp.gt.f32.partialorder %v190, 0.0
    %vm366 = vcmp.gt.f32.partialorder %v193, 0.0
    %vm367 = vcmp.gt.f32.partialorder %v196, 0.0
    %vm368 = vcmp.gt.f32.partialorder %v199, 0.0
    %vm369 = vcmp.gt.f32.partialorder %v202, 0.0
    %v370 = vld [vmem:[%s2] sm:$0xff]
    %v371 = vld [vmem:[%s2 + $0x8] sm:$0xff]
    %v372 = vld [vmem:[%s2 + $0x10] sm:$0xff]
    %v373 = vld [vmem:[%s2 + $0x18] sm:$0xff]
    %v374 = vld [vmem:[%s2 + $0x20] sm:$0xff]
    %v375 = vld [vmem:[%s2 + $0x28] sm:$0xff]
    %v376 = vld [vmem:[%s2 + $0x30] sm:$0xff]
    %v377 = vld [vmem:[%s2 + $0x38] sm:$0xff]
    %v378 = vpack.c.bf16 %v371, %v370
    %v379 = vpack.c.bf16 %v373, %v372
    %v380 = vpack.c.bf16 %v375, %v374
    %v381 = vpack.c.bf16 %v377, %v376
    %v382 = vld [vmem:[%s3] sm:$0xf]
    %vm383 = vcmask 64512
    %v385 = vsel %vm383, %v378, 0
    %v388 = vsel %vm383, %v379, 0
    %v391 = vsel %vm383, %v380, 0
    %v394 = vsel %vm383, %v381, 0
    %vm396 = vcmask 1043456
    %v398 = vsel %vm396, %v382, 0
    %400 = vmatpush.bf16.msra.mxu0 0
    %401 = vmatpush.bf16.msra.mxu0 0
    %402 = vmatpush.bf16.msra.mxu0 0
    %403 = vmatpush.bf16.msra.mxu0 0
    %404 = vmatpush.bf16.msra.mxu0 0
    %405 = vmatpush.bf16.msra.mxu0 0
    %406 = vmatpush.bf16.msra.mxu0 0
    %407 = vmatpush.bf16.msra.mxu0 %v398
    %408 = vmatmul.bf16.gmra.mxu0 %v385
    %v409 = vpop.f32.mrf.mxu0
    %v410 = vadd.f32 0.0, %v409
    %v411 = vpop.f32.mrf.mxu0
    %v412 = vadd.f32 0.0, %v411
    %413 = vmatmul.bf16.gmra.mxu0 %v388
    %v414 = vpop.f32.mrf.mxu0
    %v415 = vadd.f32 0.0, %v414
    %v416 = vpop.f32.mrf.mxu0
    %v417 = vadd.f32 0.0, %v416
    %418 = vmatmul.bf16.gmra.mxu0 %v391
    %v419 = vpop.f32.mrf.mxu0
    %v420 = vadd.f32 0.0, %v419
    %v421 = vpop.f32.mrf.mxu0
    %v422 = vadd.f32 0.0, %v421
    %423 = vmatmul.bf16.gmra.mxu0 %v394
    %v424 = vpop.f32.mrf.mxu0
    %v425 = vadd.f32 0.0, %v424
    %v426 = vpop.f32.mrf.mxu0
    %v427 = vadd.f32 0.0, %v426
    %428 = vdwg.mxu0
    %v429 = vpack.c.bf16 %v412, %v410
    %v430 = vpack.c.bf16 %v417, %v415
    %v431 = vpack.c.bf16 %v422, %v420
    %v432 = vpack.c.bf16 %v427, %v425
    %v433 = vld [vmem:[%s4] sm:$0x1]
    %v435 = vperm.slane %v433, 0
    %v438 = vsel %vm204, %v358, 0
    %v441 = vsel %vm204, %v359, 0
    %v444 = vsel %vm204, %v360, 0
    %v447 = vsel %vm204, %v361, 0
    %449 = vmatpush.bf16.msra.mxu0 0
    %450 = vmatpush.bf16.msra.mxu0 0
    %451 = vmatpush.bf16.msra.mxu0 0
    %452 = vmatpush.bf16.msra.mxu0 0
    %453 = vmatpush.bf16.msra.mxu0 %v432
    %454 = vmatpush.bf16.msra.mxu0 %v431
    %455 = vmatpush.bf16.msra.mxu0 %v430
    %456 = vmatpush.bf16.msra.mxu0 %v429
    %457 = vmatmul.bf16.gmra.mxu0 %v438
    %v458 = vpop.f32.mrf.mxu0
    %v459 = vadd.f32 %v435, %v458
    %v460 = vpop.f32.mrf.mxu0
    %v461 = vadd.f32 %v435, %v460
    %462 = vmatmul.bf16.gmra.mxu0 %v441
    %v463 = vpop.f32.mrf.mxu0
    %v464 = vadd.f32 %v435, %v463
    %v465 = vpop.f32.mrf.mxu0
    %v466 = vadd.f32 %v435, %v465
    %467 = vmatmul.bf16.gmra.mxu0 %v444
    %v468 = vpop.f32.mrf.mxu0
    %v469 = vadd.f32 %v435, %v468
    %v470 = vpop.f32.mrf.mxu0
    %v471 = vadd.f32 %v435, %v470
    %472 = vmatmul.bf16.gmra.mxu0 %v447
    %v473 = vpop.f32.mrf.mxu0
    %v474 = vadd.f32 %v435, %v473
    %v475 = vpop.f32.mrf.mxu0
    %v476 = vadd.f32 %v435, %v475
    %477 = vdwg.mxu0
    %vm478 = vcmask 130048
    %v479 = vsel %vm478, %v459, 0.0
    %v480 = vsel %vm478, %v461, 0.0
    %v481 = vadd.f32 %v479, %v480
    %v482 = vsel %vm478, %v464, 0.0
    %v483 = vadd.f32 %v481, %v482
    %v484 = vsel %vm478, %v466, 0.0
    %v485 = vadd.f32 %v483, %v484
    %v486 = vsel %vm478, %v469, 0.0
    %v487 = vadd.f32 %v485, %v486
    %v488 = vsel %vm478, %v471, 0.0
    %v489 = vadd.f32 %v487, %v488
    %v490 = vsel %vm478, %v474, 0.0
    %v491 = vadd.f32 %v489, %v490
    %v492 = vsel %vm478, %v476, 0.0
    %v493 = vadd.f32 %v491, %v492
    %v494 = vrot.slane %v493, 4
    %v495 = vadd.f32 %v493, %v494
    %v496 = vrot.slane %v495, 2
    %v497 = vadd.f32 %v495, %v496
    %v498 = vrot.slane %v497, 1
    %v499 = vadd.f32 %v497, %v498
    %v500 = vrcp.pop 64.0
    %v501 = vmul.f32 64.0, %v500
    %v502 = vsub.f32 1.0, %v501
    %v503 = vmul.f32 %v500, %v502
    %v504 = vadd.f32 %v500, %v503
    %vm505 = vweird.f32 %v500
    %v506 = vsel %vm505, %v500, %v504
    %v507 = vmul.f32 %v499, %v506
    %v508 = vsub.f32 %v459, %v507
    %v509 = vsub.f32 %v461, %v507
    %v510 = vsub.f32 %v464, %v507
    %v511 = vsub.f32 %v466, %v507
    %v512 = vsub.f32 %v469, %v507
    %v513 = vsub.f32 %v471, %v507
    %v514 = vsub.f32 %v474, %v507
    %v515 = vsub.f32 %v476, %v507
    %v516 = vmul.f32 %v508, %v508
    %v517 = vmul.f32 %v509, %v509
    %v518 = vmul.f32 %v510, %v510
    %v519 = vmul.f32 %v511, %v511
    %v520 = vmul.f32 %v512, %v512
    %v521 = vmul.f32 %v513, %v513
    %v522 = vmul.f32 %v514, %v514
    %v523 = vmul.f32 %v515, %v515
    %v524 = vsel %vm478, %v516, 0.0
    %v525 = vsel %vm478, %v517, 0.0
    %v526 = vadd.f32 %v524, %v525
    %v527 = vsel %vm478, %v518, 0.0
    %v528 = vadd.f32 %v526, %v527
    %v529 = vsel %vm478, %v519, 0.0
    %v530 = vadd.f32 %v528, %v529
    %v531 = vsel %vm478, %v520, 0.0
    %v532 = vadd.f32 %v530, %v531
    %v533 = vsel %vm478, %v521, 0.0
    %v534 = vadd.f32 %v532, %v533
    %v535 = vsel %vm478, %v522, 0.0
    %v536 = vadd.f32 %v534, %v535
    %v537 = vsel %vm478, %v523, 0.0
    %v538 = vadd.f32 %v536, %v537
    %v539 = vrot.slane %v538, 4
    %v540 = vadd.f32 %v538, %v539
    %v541 = vrot.slane %v540, 2
    %v542 = vadd.f32 %v540, %v541
    %v543 = vrot.slane %v542, 1
    %v544 = vadd.f32 %v542, %v543
    %v545 = vmul.f32 %v544, %v506
    %v546 = vadd.f32 %v545, 1e-05
    %v547 = vrsqrt.pop %v546
    %v548 = vmul.f32 %v547, %v546
    %v549 = vmul.f32 %v548, %v547
    %v550 = vmul.f32 0.5, %v549
    %v551 = vsub.f32 1.5, %v550
    %v552 = vmul.f32 %v547, %v551
    %vm553 = vweird.f32 %v546
    %vm554 = vweird.f32 %v547
    %vm555 = vmor %vm553, %vm554
    %v556 = vsel %vm555, %v547, %v552
    %v557 = vmul.f32 %v508, %v556
    %v558 = vmul.f32 %v509, %v556
    %v559 = vmul.f32 %v510, %v556
    %v560 = vmul.f32 %v511, %v556
    %v561 = vmul.f32 %v512, %v556
    %v562 = vmul.f32 %v513, %v556
    %v563 = vmul.f32 %v514, %v556
    %v564 = vmul.f32 %v515, %v556
    %v565 = vld [vmem:[%s5] sm:$0x1]
    %v567 = vperm.slane %v565, 0
    %v569 = vmul.f32 %v557, %v567
    %v570 = vmul.f32 %v558, %v567
    %v571 = vmul.f32 %v559, %v567
    %v572 = vmul.f32 %v560, %v567
    %v573 = vmul.f32 %v561, %v567
    %v574 = vmul.f32 %v562, %v567
    %v575 = vmul.f32 %v563, %v567
    %v576 = vmul.f32 %v564, %v567
    %v577 = vld [vmem:[%s6] sm:$0x1]
    %v579 = vperm.slane %v577, 0
    %v581 = vadd.f32 %v569, %v579
    %v582 = vadd.f32 %v570, %v579
    %v583 = vadd.f32 %v571, %v579
    %v584 = vadd.f32 %v572, %v579
    %v585 = vadd.f32 %v573, %v579
    %v586 = vadd.f32 %v574, %v579
    %v587 = vadd.f32 %v575, %v579
    %v588 = vadd.f32 %v576, %v579
    %v589 = vmax.f32 %v581, 0.0
    %v590 = vmax.f32 %v582, 0.0
    %v591 = vmax.f32 %v583, 0.0
    %v592 = vmax.f32 %v584, 0.0
    %v593 = vmax.f32 %v585, 0.0
    %v594 = vmax.f32 %v586, 0.0
    %v595 = vmax.f32 %v587, 0.0
    %v596 = vmax.f32 %v588, 0.0
    %v597 = vpack.c.bf16 %v590, %v589
    %v598 = vpack.c.bf16 %v592, %v591
    %v599 = vpack.c.bf16 %v594, %v593
    %v600 = vpack.c.bf16 %v596, %v595
    %v601 = vld [vmem:[%s7] sm:$0xf]
    %v602 = vld [vmem:[%s7 + $0x4] sm:$0xf]
    %v605 = vunpack.c.l.b16 %v601
    %v606 = vunpack.c.l.b16 %v602
    %v607 = vpack.c.b16 %v606, %v605
    %v610 = vsel %vm478, %v597, 0
    %v613 = vsel %vm478, %v598, 0
    %v616 = vsel %vm478, %v599, 0
    %v619 = vsel %vm478, %v600, 0
    %621 = vmatpush.bf16.msra.mxu0 0
    %622 = vmatpush.bf16.msra.mxu0 0
    %623 = vmatpush.bf16.msra.mxu0 0
    %624 = vmatpush.bf16.msra.mxu0 0
    %625 = vmatpush.bf16.msra.mxu0 0
    %626 = vmatpush.bf16.msra.mxu0 0
    %627 = vmatpush.bf16.msra.mxu0 0
    %628 = vmatpush.bf16.msra.mxu0 %v607
    %629 = vmatmul.bf16.gmra.mxu0 %v610
    %v630 = vpop.f32.mrf.mxu0
    %v631 = vadd.f32 0.0, %v630
    %v632 = vpop.f32.mrf.mxu0
    %v633 = vadd.f32 0.0, %v632
    %634 = vmatmul.bf16.gmra.mxu0 %v613
    %v635 = vpop.f32.mrf.mxu0
    %v636 = vadd.f32 0.0, %v635
    %v637 = vpop.f32.mrf.mxu0
    %v638 = vadd.f32 0.0, %v637
    %639 = vmatmul.bf16.gmra.mxu0 %v616
    %v640 = vpop.f32.mrf.mxu0
    %v641 = vadd.f32 0.0, %v640
    %v642 = vpop.f32.mrf.mxu0
    %v643 = vadd.f32 0.0, %v642
    %644 = vmatmul.bf16.gmra.mxu0 %v619
    %v645 = vpop.f32.mrf.mxu0
    %v646 = vadd.f32 0.0, %v645
    %v647 = vpop.f32.mrf.mxu0
    %v648 = vadd.f32 0.0, %v647
    %649 = vdwg.mxu0
    %v650 = vpack.c.bf16 %v633, %v631
    %v651 = vpack.c.bf16 %v638, %v636
    %v652 = vpack.c.bf16 %v643, %v641
    %v653 = vpack.c.bf16 %v648, %v646
    %v654 = vld [vmem:[%s8] sm:$0x1]
    %v656 = vperm.slane %v654, 0
    %658 = vmatpush.bf16.msra.mxu0 0
    %659 = vmatpush.bf16.msra.mxu0 0
    %660 = vmatpush.bf16.msra.mxu0 0
    %661 = vmatpush.bf16.msra.mxu0 0
    %662 = vmatpush.bf16.msra.mxu0 %v653
    %663 = vmatpush.bf16.msra.mxu0 %v652
    %664 = vmatpush.bf16.msra.mxu0 %v651
    %665 = vmatpush.bf16.msra.mxu0 %v650
    %666 = vmatmul.bf16.gmra.mxu0 %v438
    %v667 = vpop.f32.mrf.mxu0
    %v668 = vadd.f32 %v656, %v667
    %v669 = vpop.f32.mrf.mxu0
    %v670 = vadd.f32 %v656, %v669
    %671 = vmatmul.bf16.gmra.mxu0 %v441
    %v672 = vpop.f32.mrf.mxu0
    %v673 = vadd.f32 %v656, %v672
    %v674 = vpop.f32.mrf.mxu0
    %v675 = vadd.f32 %v656, %v674
    %676 = vmatmul.bf16.gmra.mxu0 %v444
    %v677 = vpop.f32.mrf.mxu0
    %v678 = vadd.f32 %v656, %v677
    %v679 = vpop.f32.mrf.mxu0
    %v680 = vadd.f32 %v656, %v679
    %681 = vmatmul.bf16.gmra.mxu0 %v447
    %v682 = vpop.f32.mrf.mxu0
    %v683 = vadd.f32 %v656, %v682
    %v684 = vpop.f32.mrf.mxu0
    %v685 = vadd.f32 %v656, %v684
    %686 = vdwg.mxu0
    %vm687 = vcmask 261120
    %v688 = vsel %vm687, %v668, 0.0
    %v689 = vsel %vm687, %v670, 0.0
    %v690 = vadd.f32 %v688, %v689
    %v691 = vsel %vm687, %v673, 0.0
    %v692 = vadd.f32 %v690, %v691
    %v693 = vsel %vm687, %v675, 0.0
    %v694 = vadd.f32 %v692, %v693
    %v695 = vsel %vm687, %v678, 0.0
    %v696 = vadd.f32 %v694, %v695
    %v697 = vsel %vm687, %v680, 0.0
    %v698 = vadd.f32 %v696, %v697
    %v699 = vsel %vm687, %v683, 0.0
    %v700 = vadd.f32 %v698, %v699
    %v701 = vsel %vm687, %v685, 0.0
    %v702 = vadd.f32 %v700, %v701
    %v703 = vrot.slane %v702, 4
    %v704 = vadd.f32 %v702, %v703
    %v705 = vrot.slane %v704, 2
    %v706 = vadd.f32 %v704, %v705
    %v707 = vrot.slane %v706, 1
    %v708 = vadd.f32 %v706, %v707
    %v709 = vmul.f32 %v708, %v506
    %v710 = vsub.f32 %v668, %v709
    %v711 = vsub.f32 %v670, %v709
    %v712 = vsub.f32 %v673, %v709
    %v713 = vsub.f32 %v675, %v709
    %v714 = vsub.f32 %v678, %v709
    %v715 = vsub.f32 %v680, %v709
    %v716 = vsub.f32 %v683, %v709
    %v717 = vsub.f32 %v685, %v709
    %v718 = vmul.f32 %v710, %v710
    %v719 = vmul.f32 %v711, %v711
    %v720 = vmul.f32 %v712, %v712
    %v721 = vmul.f32 %v713, %v713
    %v722 = vmul.f32 %v714, %v714
    %v723 = vmul.f32 %v715, %v715
    %v724 = vmul.f32 %v716, %v716
    %v725 = vmul.f32 %v717, %v717
    %v726 = vsel %vm687, %v718, 0.0
    %v727 = vsel %vm687, %v719, 0.0
    %v728 = vadd.f32 %v726, %v727
    %v729 = vsel %vm687, %v720, 0.0
    %v730 = vadd.f32 %v728, %v729
    %v731 = vsel %vm687, %v721, 0.0
    %v732 = vadd.f32 %v730, %v731
    %v733 = vsel %vm687, %v722, 0.0
    %v734 = vadd.f32 %v732, %v733
    %v735 = vsel %vm687, %v723, 0.0
    %v736 = vadd.f32 %v734, %v735
    %v737 = vsel %vm687, %v724, 0.0
    %v738 = vadd.f32 %v736, %v737
    %v739 = vsel %vm687, %v725, 0.0
    %v740 = vadd.f32 %v738, %v739
    %v741 = vrot.slane %v740, 4
    %v742 = vadd.f32 %v740, %v741
    %v743 = vrot.slane %v742, 2
    %v744 = vadd.f32 %v742, %v743
    %v745 = vrot.slane %v744, 1
    %v746 = vadd.f32 %v744, %v745
    %v747 = vmul.f32 %v746, %v506
    %v748 = vadd.f32 %v747, 1e-05
    %v749 = vrsqrt.pop %v748
    %v750 = vmul.f32 %v749, %v748
    %v751 = vmul.f32 %v750, %v749
    %v752 = vmul.f32 0.5, %v751
    %v753 = vsub.f32 1.5, %v752
    %v754 = vmul.f32 %v749, %v753
    %vm755 = vweird.f32 %v748
    %vm756 = vweird.f32 %v749
    %vm757 = vmor %vm755, %vm756
    %v758 = vsel %vm757, %v749, %v754
    %v759 = vmul.f32 %v710, %v758
    %v760 = vmul.f32 %v711, %v758
    %v761 = vmul.f32 %v712, %v758
    %v762 = vmul.f32 %v713, %v758
    %v763 = vmul.f32 %v714, %v758
    %v764 = vmul.f32 %v715, %v758
    %v765 = vmul.f32 %v716, %v758
    %v766 = vmul.f32 %v717, %v758
    %v767 = vld [vmem:[%s9] sm:$0x1]
    %v769 = vperm.slane %v767, 0
    %v771 = vmul.f32 %v759, %v769
    %v772 = vmul.f32 %v760, %v769
    %v773 = vmul.f32 %v761, %v769
    %v774 = vmul.f32 %v762, %v769
    %v775 = vmul.f32 %v763, %v769
    %v776 = vmul.f32 %v764, %v769
    %v777 = vmul.f32 %v765, %v769
    %v778 = vmul.f32 %v766, %v769
    %v779 = vld [vmem:[%s10] sm:$0x1]
    %v781 = vperm.slane %v779, 0
    %v783 = vadd.f32 %v771, %v781
    %v784 = vadd.f32 %v772, %v781
    %v785 = vadd.f32 %v773, %v781
    %v786 = vadd.f32 %v774, %v781
    %v787 = vadd.f32 %v775, %v781
    %v788 = vadd.f32 %v776, %v781
    %v789 = vadd.f32 %v777, %v781
    %v790 = vadd.f32 %v778, %v781
    %v791 = vmax.f32 %v783, 0.0
    %v792 = vmax.f32 %v784, 0.0
    %v793 = vmax.f32 %v785, 0.0
    %v794 = vmax.f32 %v786, 0.0
    %v795 = vmax.f32 %v787, 0.0
    %v796 = vmax.f32 %v788, 0.0
    %v797 = vmax.f32 %v789, 0.0
    %v798 = vmax.f32 %v790, 0.0
    %v799 = vpack.c.bf16 %v792, %v791
    %v800 = vpack.c.bf16 %v794, %v793
    %v801 = vpack.c.bf16 %v796, %v795
    %v802 = vpack.c.bf16 %v798, %v797
    %v803 = vld [vmem:[%s11] sm:$0xf]
    %v804 = vld [vmem:[%s11 + $0x4] sm:$0xf]
    %v805 = vld [vmem:[%s11 + $0x8] sm:$0xf]
    %v806 = vld [vmem:[%s11 + $0xc] sm:$0xf]
    %v811 = vunpack.c.l.b16 %v803
    %v812 = vunpack.c.l.b16 %v804
    %v813 = vunpack.c.l.b16 %v805
    %v814 = vunpack.c.l.b16 %v806
    %v815 = vpack.c.b16 %v812, %v811
    %v816 = vpack.c.b16 %v814, %v813
    %v820 = vsel %vm687, %v799, 0
    %v823 = vsel %vm687, %v800, 0
    %v826 = vsel %vm687, %v801, 0
    %v829 = vsel %vm687, %v802, 0
    %831 = vmatpush.bf16.msra.mxu0 0
    %832 = vmatpush.bf16.msra.mxu0 0
    %833 = vmatpush.bf16.msra.mxu0 0
    %834 = vmatpush.bf16.msra.mxu0 0
    %835 = vmatpush.bf16.msra.mxu0 0
    %836 = vmatpush.bf16.msra.mxu0 0
    %837 = vmatpush.bf16.msra.mxu0 %v816
    %838 = vmatpush.bf16.msra.mxu0 %v815
    %839 = vmatmul.bf16.gmra.mxu0 %v820
    %v840 = vpop.f32.mrf.mxu0
    %v841 = vadd.f32 0.0, %v840
    %v842 = vpop.f32.mrf.mxu0
    %v843 = vadd.f32 0.0, %v842
    %844 = vmatmul.bf16.gmra.mxu0 %v823
    %v845 = vpop.f32.mrf.mxu0
    %v846 = vadd.f32 0.0, %v845
    %v847 = vpop.f32.mrf.mxu0
    %v848 = vadd.f32 0.0, %v847
    %849 = vmatmul.bf16.gmra.mxu0 %v826
    %v850 = vpop.f32.mrf.mxu0
    %v851 = vadd.f32 0.0, %v850
    %v852 = vpop.f32.mrf.mxu0
    %v853 = vadd.f32 0.0, %v852
    %854 = vmatmul.bf16.gmra.mxu0 %v829
    %v855 = vpop.f32.mrf.mxu0
    %v856 = vadd.f32 0.0, %v855
    %v857 = vpop.f32.mrf.mxu0
    %v858 = vadd.f32 0.0, %v857
    %859 = vdwg.mxu0
    %v860 = vpack.c.bf16 %v843, %v841
    %v861 = vpack.c.bf16 %v848, %v846
    %v862 = vpack.c.bf16 %v853, %v851
    %v863 = vpack.c.bf16 %v858, %v856
    %v864 = vld [vmem:[%s12] sm:$0x1]
    %v866 = vperm.slane %v864, 0
    %868 = vmatpush.bf16.msra.mxu0 0
    %869 = vmatpush.bf16.msra.mxu0 0
    %870 = vmatpush.bf16.msra.mxu0 0
    %871 = vmatpush.bf16.msra.mxu0 0
    %872 = vmatpush.bf16.msra.mxu0 %v863
    %873 = vmatpush.bf16.msra.mxu0 %v862
    %874 = vmatpush.bf16.msra.mxu0 %v861
    %875 = vmatpush.bf16.msra.mxu0 %v860
    %876 = vmatmul.bf16.gmra.mxu0 %v438
    %v877 = vpop.f32.mrf.mxu0
    %v878 = vadd.f32 %v866, %v877
    %v879 = vpop.f32.mrf.mxu0
    %v880 = vadd.f32 %v866, %v879
    %881 = vmatmul.bf16.gmra.mxu0 %v441
    %v882 = vpop.f32.mrf.mxu0
    %v883 = vadd.f32 %v866, %v882
    %v884 = vpop.f32.mrf.mxu0
    %v885 = vadd.f32 %v866, %v884
    %886 = vmatmul.bf16.gmra.mxu0 %v444
    %v887 = vpop.f32.mrf.mxu0
    %v888 = vadd.f32 %v866, %v887
    %v889 = vpop.f32.mrf.mxu0
    %v890 = vadd.f32 %v866, %v889
    %891 = vmatmul.bf16.gmra.mxu0 %v447
    %v892 = vpop.f32.mrf.mxu0
    %v893 = vadd.f32 %v866, %v892
    %v894 = vpop.f32.mrf.mxu0
    %v895 = vadd.f32 %v866, %v894
    %896 = vdwg.mxu0
    %v897 = vsel %vm687, %v878, 0.0
    %v898 = vsel %vm687, %v880, 0.0
    %v899 = vadd.f32 %v897, %v898
    %v900 = vsel %vm687, %v883, 0.0
    %v901 = vadd.f32 %v899, %v900
    %v902 = vsel %vm687, %v885, 0.0
    %v903 = vadd.f32 %v901, %v902
    %v904 = vsel %vm687, %v888, 0.0
    %v905 = vadd.f32 %v903, %v904
    %v906 = vsel %vm687, %v890, 0.0
    %v907 = vadd.f32 %v905, %v906
    %v908 = vsel %vm687, %v893, 0.0
    %v909 = vadd.f32 %v907, %v908
    %v910 = vsel %vm687, %v895, 0.0
    %v911 = vadd.f32 %v909, %v910
    %v912 = vrot.slane %v911, 4
    %v913 = vadd.f32 %v911, %v912
    %v914 = vrot.slane %v913, 2
    %v915 = vadd.f32 %v913, %v914
    %v916 = vrot.slane %v915, 1
    %v917 = vadd.f32 %v915, %v916
    %v918 = vmul.f32 %v917, %v506
    %v919 = vsub.f32 %v878, %v918
    %v920 = vsub.f32 %v880, %v918
    %v921 = vsub.f32 %v883, %v918
    %v922 = vsub.f32 %v885, %v918
    %v923 = vsub.f32 %v888, %v918
    %v924 = vsub.f32 %v890, %v918
    %v925 = vsub.f32 %v893, %v918
    %v926 = vsub.f32 %v895, %v918
    %v927 = vmul.f32 %v919, %v919
    %v928 = vmul.f32 %v920, %v920
    %v929 = vmul.f32 %v921, %v921
    %v930 = vmul.f32 %v922, %v922
    %v931 = vmul.f32 %v923, %v923
    %v932 = vmul.f32 %v924, %v924
    %v933 = vmul.f32 %v925, %v925
    %v934 = vmul.f32 %v926, %v926
    %v935 = vsel %vm687, %v927, 0.0
    %v936 = vsel %vm687, %v928, 0.0
    %v937 = vadd.f32 %v935, %v936
    %v938 = vsel %vm687, %v929, 0.0
    %v939 = vadd.f32 %v937, %v938
    %v940 = vsel %vm687, %v930, 0.0
    %v941 = vadd.f32 %v939, %v940
    %v942 = vsel %vm687, %v931, 0.0
    %v943 = vadd.f32 %v941, %v942
    %v944 = vsel %vm687, %v932, 0.0
    %v945 = vadd.f32 %v943, %v944
    %v946 = vsel %vm687, %v933, 0.0
    %v947 = vadd.f32 %v945, %v946
    %v948 = vsel %vm687, %v934, 0.0
    %v949 = vadd.f32 %v947, %v948
    %v950 = vrot.slane %v949, 4
    %v951 = vadd.f32 %v949, %v950
    %v952 = vrot.slane %v951, 2
    %v953 = vadd.f32 %v951, %v952
    %v954 = vrot.slane %v953, 1
    %v955 = vadd.f32 %v953, %v954
    %v956 = vmul.f32 %v955, %v506
    %v957 = vadd.f32 %v956, 1e-05
    %v958 = vrsqrt.pop %v957
    %v959 = vmul.f32 %v958, %v957
    %v960 = vmul.f32 %v959, %v958
    %v961 = vmul.f32 0.5, %v960
    %v962 = vsub.f32 1.5, %v961
    %v963 = vmul.f32 %v958, %v962
    %vm964 = vweird.f32 %v957
    %vm965 = vweird.f32 %v958
    %vm966 = vmor %vm964, %vm965
    %v967 = vsel %vm966, %v958, %v963
    %v968 = vmul.f32 %v919, %v967
    %v969 = vmul.f32 %v920, %v967
    %v970 = vmul.f32 %v921, %v967
    %v971 = vmul.f32 %v922, %v967
    %v972 = vmul.f32 %v923, %v967
    %v973 = vmul.f32 %v924, %v967
    %v974 = vmul.f32 %v925, %v967
    %v975 = vmul.f32 %v926, %v967
    %v976 = vld [vmem:[%s13] sm:$0x1]
    %v978 = vperm.slane %v976, 0
    %v980 = vmul.f32 %v968, %v978
    %v981 = vmul.f32 %v969, %v978
    %v982 = vmul.f32 %v970, %v978
    %v983 = vmul.f32 %v971, %v978
    %v984 = vmul.f32 %v972, %v978
    %v985 = vmul.f32 %v973, %v978
    %v986 = vmul.f32 %v974, %v978
    %v987 = vmul.f32 %v975, %v978
    %v988 = vld [vmem:[%s14] sm:$0x1]
    %v990 = vperm.slane %v988, 0
    %v992 = vadd.f32 %v980, %v990
    %v993 = vadd.f32 %v981, %v990
    %v994 = vadd.f32 %v982, %v990
    %v995 = vadd.f32 %v983, %v990
    %v996 = vadd.f32 %v984, %v990
    %v997 = vadd.f32 %v985, %v990
    %v998 = vadd.f32 %v986, %v990
    %v999 = vadd.f32 %v987, %v990
    %v1000 = vmax.f32 %v992, 0.0
    %v1001 = vmax.f32 %v993, 0.0
    %v1002 = vmax.f32 %v994, 0.0
    %v1003 = vmax.f32 %v995, 0.0
    %v1004 = vmax.f32 %v996, 0.0
    %v1005 = vmax.f32 %v997, 0.0
    %v1006 = vmax.f32 %v998, 0.0
    %v1007 = vmax.f32 %v999, 0.0
    %v1008 = vpack.c.bf16 %v1001, %v1000
    %v1009 = vpack.c.bf16 %v1003, %v1002
    %v1010 = vpack.c.bf16 %v1005, %v1004
    %v1011 = vpack.c.bf16 %v1007, %v1006
    %v1012 = vld [vmem:[%s15] sm:$0xf]
    %v1013 = vld [vmem:[%s15 + $0x4] sm:$0xf]
    %v1014 = vld [vmem:[%s15 + $0x8] sm:$0xf]
    %v1015 = vld [vmem:[%s15 + $0xc] sm:$0xf]
    %v1020 = vunpack.c.l.b16 %v1012
    %v1021 = vunpack.c.l.b16 %v1013
    %v1022 = vunpack.c.l.b16 %v1014
    %v1023 = vunpack.c.l.b16 %v1015
    %v1024 = vpack.c.b16 %v1021, %v1020
    %v1025 = vpack.c.b16 %v1023, %v1022
    %v1029 = vsel %vm687, %v1008, 0
    %v1032 = vsel %vm687, %v1009, 0
    %v1035 = vsel %vm687, %v1010, 0
    %v1038 = vsel %vm687, %v1011, 0
    %1040 = vmatpush.bf16.msra.mxu0 0
    %1041 = vmatpush.bf16.msra.mxu0 0
    %1042 = vmatpush.bf16.msra.mxu0 0
    %1043 = vmatpush.bf16.msra.mxu0 0
    %1044 = vmatpush.bf16.msra.mxu0 0
    %1045 = vmatpush.bf16.msra.mxu0 0
    %1046 = vmatpush.bf16.msra.mxu0 %v1025
    %1047 = vmatpush.bf16.msra.mxu0 %v1024
    %1048 = vmatmul.bf16.gmra.mxu0 %v1029
    %v1049 = vpop.f32.mrf.mxu0
    %v1050 = vadd.f32 0.0, %v1049
    %v1051 = vpop.f32.mrf.mxu0
    %v1052 = vadd.f32 0.0, %v1051
    %1053 = vmatmul.bf16.gmra.mxu0 %v1032
    %v1054 = vpop.f32.mrf.mxu0
    %v1055 = vadd.f32 0.0, %v1054
    %v1056 = vpop.f32.mrf.mxu0
    %v1057 = vadd.f32 0.0, %v1056
    %1058 = vmatmul.bf16.gmra.mxu0 %v1035
    %v1059 = vpop.f32.mrf.mxu0
    %v1060 = vadd.f32 0.0, %v1059
    %v1061 = vpop.f32.mrf.mxu0
    %v1062 = vadd.f32 0.0, %v1061
    %1063 = vmatmul.bf16.gmra.mxu0 %v1038
    %v1064 = vpop.f32.mrf.mxu0
    %v1065 = vadd.f32 0.0, %v1064
    %v1066 = vpop.f32.mrf.mxu0
    %v1067 = vadd.f32 0.0, %v1066
    %1068 = vdwg.mxu0
    %v1069 = vpack.c.bf16 %v1050, %v1050
    %v1070 = vpack.c.bf16 %v1052, %v1052
    %v1071 = vpack.c.bf16 %v1055, %v1055
    %v1072 = vpack.c.bf16 %v1057, %v1057
    %v1073 = vpack.c.bf16 %v1060, %v1060
    %v1074 = vpack.c.bf16 %v1062, %v1062
    %v1075 = vpack.c.bf16 %v1065, %v1065
    %v1076 = vpack.c.bf16 %v1067, %v1067
    %v1077 = vld [vmem:[%s16] sm:$0xf]
    %v1078 = vld [vmem:[%s16 + $0x4] sm:$0xf]
    %v1079 = vld [vmem:[%s16 + $0x8] sm:$0xf]
    %v1080 = vld [vmem:[%s16 + $0xc] sm:$0xf]
    %v1081 = vld [vmem:[%s16 + $0x10] sm:$0xf]
    %v1082 = vld [vmem:[%s16 + $0x14] sm:$0xf]
    %v1083 = vld [vmem:[%s16 + $0x18] sm:$0xf]
    %v1084 = vld [vmem:[%s16 + $0x1c] sm:$0xf]
    %v1085 = vld [vmem:[%s16 + $0x20] sm:$0xf]
    %v1086 = vld [vmem:[%s16 + $0x24] sm:$0xf]
    %v1087 = vld [vmem:[%s16 + $0x28] sm:$0xf]
    %v1088 = vld [vmem:[%s16 + $0x2c] sm:$0xf]
    %v1089 = vld [vmem:[%s16 + $0x30] sm:$0xf]
    %v1090 = vld [vmem:[%s16 + $0x34] sm:$0xf]
    %v1091 = vld [vmem:[%s16 + $0x38] sm:$0xf]
    %v1092 = vld [vmem:[%s16 + $0x3c] sm:$0xf]
    %v1101 = vunpack.c.l.b16 %v1069
    %v1102 = vunpack.c.l.b16 %v1070
    %v1103 = vunpack.c.l.b16 %v1071
    %v1104 = vunpack.c.l.b16 %v1072
    %v1105 = vunpack.c.l.b16 %v1073
    %v1106 = vunpack.c.l.b16 %v1074
    %v1107 = vunpack.c.l.b16 %v1075
    %v1108 = vunpack.c.l.b16 %v1076
    %v1109 = vpack.c.b16 %v1102, %v1101
    %v1110 = vpack.c.b16 %v1104, %v1103
    %v1111 = vpack.c.b16 %v1106, %v1105
    %v1112 = vpack.c.b16 %v1108, %v1107
    %v1133 = vunpack.c.l.b16 %v1077
    %v1134 = vunpack.c.l.b16 %v1078
    %v1135 = vunpack.c.l.b16 %v1079
    %v1136 = vunpack.c.l.b16 %v1080
    %v1137 = vunpack.c.l.b16 %v1081
    %v1138 = vunpack.c.l.b16 %v1082
    %v1139 = vunpack.c.l.b16 %v1083
    %v1140 = vunpack.c.l.b16 %v1084
    %v1141 = vunpack.c.l.b16 %v1085
    %v1142 = vunpack.c.l.b16 %v1086
    %v1143 = vunpack.c.l.b16 %v1087
    %v1144 = vunpack.c.l.b16 %v1088
    %v1145 = vunpack.c.l.b16 %v1089
    %v1146 = vunpack.c.l.b16 %v1090
    %v1147 = vunpack.c.l.b16 %v1091
    %v1148 = vunpack.c.l.b16 %v1092
    %v1149 = vpack.c.b16 %v1134, %v1133
    %v1150 = vpack.c.b16 %v1136, %v1135
    %v1151 = vpack.c.b16 %v1138, %v1137
    %v1152 = vpack.c.b16 %v1140, %v1139
    %v1153 = vpack.c.b16 %v1142, %v1141
    %v1154 = vpack.c.b16 %v1144, %v1143
    %v1155 = vpack.c.b16 %v1146, %v1145
    %v1156 = vpack.c.b16 %v1148, %v1147
    %1165 = vmatpush.bf16.msra.mxu0 %v1156
    %1166 = vmatpush.bf16.msra.mxu0 %v1155
    %1167 = vmatpush.bf16.msra.mxu0 %v1154
    %1168 = vmatpush.bf16.msra.mxu0 %v1153
    %1169 = vmatpush.bf16.msra.mxu0 %v1152
    %1170 = vmatpush.bf16.msra.mxu0 %v1151
    %1171 = vmatpush.bf16.msra.mxu0 %v1150
    %1172 = vmatpush.bf16.msra.mxu0 %v1149
    %1173 = vmatmul.bf16.gmra.mxu0 %v1109
    %v1174 = vpop.f32.mrf.mxu0
    %v1175 = vadd.f32 0.0, %v1174
    %v1176 = vpop.f32.mrf.mxu0
    %v1177 = vadd.f32 0.0, %v1176
    %1178 = vmatmul.bf16.gmra.mxu0 %v1110
    %v1179 = vpop.f32.mrf.mxu0
    %v1180 = vadd.f32 0.0, %v1179
    %v1181 = vpop.f32.mrf.mxu0
    %v1182 = vadd.f32 0.0, %v1181
    %1183 = vmatmul.bf16.gmra.mxu0 %v1111
    %v1184 = vpop.f32.mrf.mxu0
    %v1185 = vadd.f32 0.0, %v1184
    %v1186 = vpop.f32.mrf.mxu0
    %v1187 = vadd.f32 0.0, %v1186
    %1188 = vmatmul.bf16.gmra.mxu0 %v1112
    %v1189 = vpop.f32.mrf.mxu0
    %v1190 = vadd.f32 0.0, %v1189
    %v1191 = vpop.f32.mrf.mxu0
    %v1192 = vadd.f32 0.0, %v1191
    %1193 = vdwg.mxu0
    %v1194 = vld [vmem:[%s17] sm:$0xf]
    %v1195 = vld [vmem:[%s17 + $0x4] sm:$0xf]
    %v1196 = vld [vmem:[%s17 + $0x8] sm:$0xf]
    %v1197 = vld [vmem:[%s17 + $0xc] sm:$0xf]
    %v1198 = vld [vmem:[%s17 + $0x10] sm:$0xf]
    %v1199 = vld [vmem:[%s17 + $0x14] sm:$0xf]
    %v1200 = vld [vmem:[%s17 + $0x18] sm:$0xf]
    %v1201 = vld [vmem:[%s17 + $0x1c] sm:$0xf]
    %v1202 = vld [vmem:[%s17 + $0x20] sm:$0xf]
    %v1203 = vld [vmem:[%s17 + $0x24] sm:$0xf]
    %v1204 = vld [vmem:[%s17 + $0x28] sm:$0xf]
    %v1205 = vld [vmem:[%s17 + $0x2c] sm:$0xf]
    %v1206 = vld [vmem:[%s17 + $0x30] sm:$0xf]
    %v1207 = vld [vmem:[%s17 + $0x34] sm:$0xf]
    %v1208 = vld [vmem:[%s17 + $0x38] sm:$0xf]
    %v1209 = vld [vmem:[%s17 + $0x3c] sm:$0xf]
    %v1226 = vunpack.c.l.b16 %v1194
    %v1227 = vunpack.c.l.b16 %v1195
    %v1228 = vunpack.c.l.b16 %v1196
    %v1229 = vunpack.c.l.b16 %v1197
    %v1230 = vunpack.c.l.b16 %v1198
    %v1231 = vunpack.c.l.b16 %v1199
    %v1232 = vunpack.c.l.b16 %v1200
    %v1233 = vunpack.c.l.b16 %v1201
    %v1234 = vunpack.c.l.b16 %v1202
    %v1235 = vunpack.c.l.b16 %v1203
    %v1236 = vunpack.c.l.b16 %v1204
    %v1237 = vunpack.c.l.b16 %v1205
    %v1238 = vunpack.c.l.b16 %v1206
    %v1239 = vunpack.c.l.b16 %v1207
    %v1240 = vunpack.c.l.b16 %v1208
    %v1241 = vunpack.c.l.b16 %v1209
    %v1242 = vpack.c.b16 %v1227, %v1226
    %v1243 = vpack.c.b16 %v1229, %v1228
    %v1244 = vpack.c.b16 %v1231, %v1230
    %v1245 = vpack.c.b16 %v1233, %v1232
    %v1246 = vpack.c.b16 %v1235, %v1234
    %v1247 = vpack.c.b16 %v1237, %v1236
    %v1248 = vpack.c.b16 %v1239, %v1238
    %v1249 = vpack.c.b16 %v1241, %v1240
    %1258 = vmatpush.bf16.msra.mxu0 %v1249
    %1259 = vmatpush.bf16.msra.mxu0 %v1248
    %1260 = vmatpush.bf16.msra.mxu0 %v1247
    %1261 = vmatpush.bf16.msra.mxu0 %v1246
    %1262 = vmatpush.bf16.msra.mxu0 %v1245
    %1263 = vmatpush.bf16.msra.mxu0 %v1244
    %1264 = vmatpush.bf16.msra.mxu0 %v1243
    %1265 = vmatpush.bf16.msra.mxu0 %v1242
    %1266 = vmatmul.bf16.gmra.mxu0 %v1109
    %v1267 = vpop.f32.mrf.mxu0
    %v1268 = vadd.f32 0.0, %v1267
    %v1269 = vpop.f32.mrf.mxu0
    %v1270 = vadd.f32 0.0, %v1269
    %1271 = vmatmul.bf16.gmra.mxu0 %v1110
    %v1272 = vpop.f32.mrf.mxu0
    %v1273 = vadd.f32 0.0, %v1272
    %v1274 = vpop.f32.mrf.mxu0
    %v1275 = vadd.f32 0.0, %v1274
    %1276 = vmatmul.bf16.gmra.mxu0 %v1111
    %v1277 = vpop.f32.mrf.mxu0
    %v1278 = vadd.f32 0.0, %v1277
    %v1279 = vpop.f32.mrf.mxu0
    %v1280 = vadd.f32 0.0, %v1279
    %1281 = vmatmul.bf16.gmra.mxu0 %v1112
    %v1282 = vpop.f32.mrf.mxu0
    %v1283 = vadd.f32 0.0, %v1282
    %v1284 = vpop.f32.mrf.mxu0
    %v1285 = vadd.f32 0.0, %v1284
    %1286 = vdwg.mxu0
    %1287 = vxpose.xlu0.b32.start [1/16] %v1175, 128
    %1288 = vxpose.xlu0.b32.cont [2/16] %v1177, 128
    %1289 = vxpose.xlu0.b32.cont [3/16] %v1180, 128
    %1290 = vxpose.xlu0.b32.cont [4/16] %v1182, 128
    %1291 = vxpose.xlu0.b32.cont [5/16] %v1185, 128
    %1292 = vxpose.xlu0.b32.cont [6/16] %v1187, 128
    %1293 = vxpose.xlu0.b32.cont [7/16] %v1190, 128
    %1294 = vxpose.xlu0.b32.cont [8/16] %v1192, 128
    %1295 = vxpose.xlu0.b32.cont [9/16] 0.0, 128
    %1296 = vxpose.xlu0.b32.cont [10/16] 0.0, 128
    %1297 = vxpose.xlu0.b32.cont [11/16] 0.0, 128
    %1298 = vxpose.xlu0.b32.cont [12/16] 0.0, 128
    %1299 = vxpose.xlu0.b32.cont [13/16] 0.0, 128
    %1300 = vxpose.xlu0.b32.cont [14/16] 0.0, 128
    %1301 = vxpose.xlu0.b32.cont [15/16] 0.0, 128
    %1302 = vxpose.xlu0.b32.end [16/16] 0.0, 128
    %v1303 = vpop.trf.xlu0
    %v1304 = vpop.trf.xlu0
    %v1305 = vpop.trf.xlu0
    %v1306 = vpop.trf.xlu0
    %v1307 = vpop.trf.xlu0
    %v1308 = vpop.trf.xlu0
    %v1309 = vpop.trf.xlu0
    %v1310 = vpop.trf.xlu0
    %v1311 = vpop.trf.xlu0
    %v1312 = vpop.trf.xlu0
    %v1313 = vpop.trf.xlu0
    %v1314 = vpop.trf.xlu0
    %v1315 = vpop.trf.xlu0
    %v1316 = vpop.trf.xlu0
    %v1317 = vpop.trf.xlu0
    %v1318 = vpop.trf.xlu0
    %1320 = vset.pattern.permute.xlu0 0
    %1321 = vperm.xlu0 %1320, %v1268
    %v1322 = vpop.permute.xlu0 %1321
    %1325 = vset.pattern.permute.xlu0 0
    %1326 = vperm.xlu0 %1325, %v1270
    %v1327 = vpop.permute.xlu0 %1326
    %1330 = vset.pattern.permute.xlu0 0
    %1331 = vperm.xlu0 %1330, %v1273
    %v1332 = vpop.permute.xlu0 %1331
    %1335 = vset.pattern.permute.xlu0 0
    %1336 = vperm.xlu0 %1335, %v1275
    %v1337 = vpop.permute.xlu0 %1336
    %1340 = vset.pattern.permute.xlu0 0
    %1341 = vperm.xlu0 %1340, %v1278
    %v1342 = vpop.permute.xlu0 %1341
    %1345 = vset.pattern.permute.xlu0 0
    %1346 = vperm.xlu0 %1345, %v1280
    %v1347 = vpop.permute.xlu0 %1346
    %1350 = vset.pattern.permute.xlu0 0
    %1351 = vperm.xlu0 %1350, %v1283
    %v1352 = vpop.permute.xlu0 %1351
    %1355 = vset.pattern.permute.xlu0 0
    %1356 = vperm.xlu0 %1355, %v1285
    %v1357 = vpop.permute.xlu0 %1356
    %v1359 = vperm.slane %v1303, 0
    %v1360 = vadd.f32 %v1322, %v1359
    %v1361 = vadd.f32 %v1327, %v1359
    %v1362 = vadd.f32 %v1332, %v1359
    %v1363 = vadd.f32 %v1337, %v1359
    %v1364 = vadd.f32 %v1342, %v1359
    %v1365 = vadd.f32 %v1347, %v1359
    %v1366 = vadd.f32 %v1352, %v1359
    %v1367 = vadd.f32 %v1357, %v1359
    %vm1368 = vcmp.gt.f32.partialorder %v1360, 0.0
    %vm1369 = vcmp.gt.f32.partialorder %v1361, 0.0
    %vm1370 = vcmp.gt.f32.partialorder %v1362, 0.0
    %vm1371 = vcmp.gt.f32.partialorder %v1363, 0.0
    %vm1372 = vcmp.gt.f32.partialorder %v1364, 0.0
    %vm1373 = vcmp.gt.f32.partialorder %v1365, 0.0
    %vm1374 = vcmp.gt.f32.partialorder %v1366, 0.0
    %vm1375 = vcmp.gt.f32.partialorder %v1367, 0.0
    %v1376 = vmul.f32 %v1360, 0.2
    %v1377 = vmul.f32 %v1361, 0.2
    %v1378 = vmul.f32 %v1362, 0.2
    %v1379 = vmul.f32 %v1363, 0.2
    %v1380 = vmul.f32 %v1364, 0.2
    %v1381 = vmul.f32 %v1365, 0.2
    %v1382 = vmul.f32 %v1366, 0.2
    %v1383 = vmul.f32 %v1367, 0.2
    %v1384 = vsel %vm1368, %v1360, %v1376
    %v1385 = vsel %vm1369, %v1361, %v1377
    %v1386 = vsel %vm1370, %v1362, %v1378
    %v1387 = vsel %vm1371, %v1363, %v1379
    %v1388 = vsel %vm1372, %v1364, %v1380
    %v1389 = vsel %vm1373, %v1365, %v1381
    %v1390 = vsel %vm1374, %v1366, %v1382
    %v1391 = vsel %vm1375, %v1367, %v1383
    %v1392 = vsel %vm362, %v1384, -1e+30
    %v1393 = vsel %vm363, %v1385, -1e+30
    %v1394 = vsel %vm364, %v1386, -1e+30
    %v1395 = vsel %vm365, %v1387, -1e+30
    %v1396 = vsel %vm366, %v1388, -1e+30
    %v1397 = vsel %vm367, %v1389, -1e+30
    %v1398 = vsel %vm368, %v1390, -1e+30
    %v1399 = vsel %vm369, %v1391, -1e+30
    %v1400 = vsel %vm204, %v1392, -inf
    %1401 = vmax.xlane.f32.xlu0 %v1400
    %v1402 = vpop.xlane.xlu0 %1401
    %v1403 = vsel %vm204, %v1393, -inf
    %1404 = vmax.xlane.f32.xlu0 %v1403
    %v1405 = vpop.xlane.xlu0 %1404
    %v1406 = vsel %vm204, %v1394, -inf
    %1407 = vmax.xlane.f32.xlu0 %v1406
    %v1408 = vpop.xlane.xlu0 %1407
    %v1409 = vsel %vm204, %v1395, -inf
    %1410 = vmax.xlane.f32.xlu0 %v1409
    %v1411 = vpop.xlane.xlu0 %1410
    %v1412 = vsel %vm204, %v1396, -inf
    %1413 = vmax.xlane.f32.xlu0 %v1412
    %v1414 = vpop.xlane.xlu0 %1413
    %v1415 = vsel %vm204, %v1397, -inf
    %1416 = vmax.xlane.f32.xlu0 %v1415
    %v1417 = vpop.xlane.xlu0 %1416
    %v1418 = vsel %vm204, %v1398, -inf
    %1419 = vmax.xlane.f32.xlu0 %v1418
    %v1420 = vpop.xlane.xlu0 %1419
    %v1421 = vsel %vm204, %v1399, -inf
    %1422 = vmax.xlane.f32.xlu0 %v1421
    %v1423 = vpop.xlane.xlu0 %1422
    %v1424 = vsub.f32 %v1392, %v1402
    %v1425 = vsub.f32 %v1393, %v1405
    %v1426 = vsub.f32 %v1394, %v1408
    %v1427 = vsub.f32 %v1395, %v1411
    %v1428 = vsub.f32 %v1396, %v1414
    %v1429 = vsub.f32 %v1397, %v1417
    %v1430 = vsub.f32 %v1398, %v1420
    %v1431 = vsub.f32 %v1399, %v1423
    %v1432 = vmul.f32 %v1424, 1.442695
    %v1433 = vpow.pop %v1432
    %v1434 = vmul.f32 %v1425, 1.442695
    %v1435 = vpow.pop %v1434
    %v1436 = vmul.f32 %v1426, 1.442695
    %v1437 = vpow.pop %v1436
    %v1438 = vmul.f32 %v1427, 1.442695
    %v1439 = vpow.pop %v1438
    %v1440 = vmul.f32 %v1428, 1.442695
    %v1441 = vpow.pop %v1440
    %v1442 = vmul.f32 %v1429, 1.442695
    %v1443 = vpow.pop %v1442
    %v1444 = vmul.f32 %v1430, 1.442695
    %v1445 = vpow.pop %v1444
    %v1446 = vmul.f32 %v1431, 1.442695
    %v1447 = vpow.pop %v1446
    %v1448 = vsel %vm204, %v1433, 0.0
    %1449 = vadd.xlane.f32.xlu0 %v1448
    %v1450 = vpop.xlane.xlu0 %1449
    %v1451 = vsel %vm204, %v1435, 0.0
    %1452 = vadd.xlane.f32.xlu0 %v1451
    %v1453 = vpop.xlane.xlu0 %1452
    %v1454 = vsel %vm204, %v1437, 0.0
    %1455 = vadd.xlane.f32.xlu0 %v1454
    %v1456 = vpop.xlane.xlu0 %1455
    %v1457 = vsel %vm204, %v1439, 0.0
    %1458 = vadd.xlane.f32.xlu0 %v1457
    %v1459 = vpop.xlane.xlu0 %1458
    %v1460 = vsel %vm204, %v1441, 0.0
    %1461 = vadd.xlane.f32.xlu0 %v1460
    %v1462 = vpop.xlane.xlu0 %1461
    %v1463 = vsel %vm204, %v1443, 0.0
    %1464 = vadd.xlane.f32.xlu0 %v1463
    %v1465 = vpop.xlane.xlu0 %1464
    %v1466 = vsel %vm204, %v1445, 0.0
    %1467 = vadd.xlane.f32.xlu0 %v1466
    %v1468 = vpop.xlane.xlu0 %1467
    %v1469 = vsel %vm204, %v1447, 0.0
    %1470 = vadd.xlane.f32.xlu0 %v1469
    %v1471 = vpop.xlane.xlu0 %1470
    %v1472 = vrcp.pop %v1450
    %v1473 = vrcp.pop %v1453
    %v1474 = vrcp.pop %v1456
    %v1475 = vrcp.pop %v1459
    %v1476 = vrcp.pop %v1462
    %v1477 = vrcp.pop %v1465
    %v1478 = vrcp.pop %v1468
    %v1479 = vrcp.pop %v1471
    %v1480 = vmul.f32 %v1433, %v1472
    %v1481 = vmul.f32 %v1435, %v1473
    %v1482 = vmul.f32 %v1437, %v1474
    %v1483 = vmul.f32 %v1439, %v1475
    %v1484 = vmul.f32 %v1441, %v1476
    %v1485 = vmul.f32 %v1443, %v1477
    %v1486 = vmul.f32 %v1445, %v1478
    %v1487 = vmul.f32 %v1447, %v1479
    %v1488 = vpack.c.bf16 %v1481, %v1480
    %v1489 = vpack.c.bf16 %v1483, %v1482
    %v1490 = vpack.c.bf16 %v1485, %v1484
    %v1491 = vpack.c.bf16 %v1487, %v1486
    %1500 = vrot.lane.b32.xlu0 %v1175, 127
    %v1501 = vpop.permute.xlu0 %1500
    %1502 = vrot.lane.b32.xlu0 %v1177, 127
    %v1503 = vpop.permute.xlu0 %1502
    %1504 = vrot.lane.b32.xlu0 %v1180, 127
    %v1505 = vpop.permute.xlu0 %1504
    %1506 = vrot.lane.b32.xlu0 %v1182, 127
    %v1507 = vpop.permute.xlu0 %1506
    %1508 = vrot.lane.b32.xlu0 %v1185, 127
    %v1509 = vpop.permute.xlu0 %1508
    %1510 = vrot.lane.b32.xlu0 %v1187, 127
    %v1511 = vpop.permute.xlu0 %1510
    %1512 = vrot.lane.b32.xlu0 %v1190, 127
    %v1513 = vpop.permute.xlu0 %1512
    %1514 = vrot.lane.b32.xlu0 %v1192, 127
    %v1515 = vpop.permute.xlu0 %1514
    %1524 = vxpose.xlu0.b32.start [1/16] %v1501, 128
    %1525 = vxpose.xlu0.b32.cont [2/16] %v1503, 128
    %1526 = vxpose.xlu0.b32.cont [3/16] %v1505, 128
    %1527 = vxpose.xlu0.b32.cont [4/16] %v1507, 128
    %1528 = vxpose.xlu0.b32.cont [5/16] %v1509, 128
    %1529 = vxpose.xlu0.b32.cont [6/16] %v1511, 128
    %1530 = vxpose.xlu0.b32.cont [7/16] %v1513, 128
    %1531 = vxpose.xlu0.b32.cont [8/16] %v1515, 128
    %1532 = vxpose.xlu0.b32.cont [9/16] 0.0, 128
    %1533 = vxpose.xlu0.b32.cont [10/16] 0.0, 128
    %1534 = vxpose.xlu0.b32.cont [11/16] 0.0, 128
    %1535 = vxpose.xlu0.b32.cont [12/16] 0.0, 128
    %1536 = vxpose.xlu0.b32.cont [13/16] 0.0, 128
    %1537 = vxpose.xlu0.b32.cont [14/16] 0.0, 128
    %1538 = vxpose.xlu0.b32.cont [15/16] 0.0, 128
    %1539 = vxpose.xlu0.b32.end [16/16] 0.0, 128
    %v1540 = vpop.trf.xlu0
    %v1541 = vpop.trf.xlu0
    %v1542 = vpop.trf.xlu0
    %v1543 = vpop.trf.xlu0
    %v1544 = vpop.trf.xlu0
    %v1545 = vpop.trf.xlu0
    %v1546 = vpop.trf.xlu0
    %v1547 = vpop.trf.xlu0
    %v1548 = vpop.trf.xlu0
    %v1549 = vpop.trf.xlu0
    %v1550 = vpop.trf.xlu0
    %v1551 = vpop.trf.xlu0
    %v1552 = vpop.trf.xlu0
    %v1553 = vpop.trf.xlu0
    %v1554 = vpop.trf.xlu0
    %v1555 = vpop.trf.xlu0
    %1556 = vset.pattern.permute.xlu0 1
    %1557 = vperm.xlu0 %1556, %v1268
    %v1558 = vpop.permute.xlu0 %1557
    %1560 = vset.pattern.permute.xlu0 1
    %1561 = vperm.xlu0 %1560, %v1270
    %v1562 = vpop.permute.xlu0 %1561
    %1564 = vset.pattern.permute.xlu0 1
    %1565 = vperm.xlu0 %1564, %v1273
    %v1566 = vpop.permute.xlu0 %1565
    %1568 = vset.pattern.permute.xlu0 1
    %1569 = vperm.xlu0 %1568, %v1275
    %v1570 = vpop.permute.xlu0 %1569
    %1572 = vset.pattern.permute.xlu0 1
    %1573 = vperm.xlu0 %1572, %v1278
    %v1574 = vpop.permute.xlu0 %1573
    %1576 = vset.pattern.permute.xlu0 1
    %1577 = vperm.xlu0 %1576, %v1280
    %v1578 = vpop.permute.xlu0 %1577
    %1580 = vset.pattern.permute.xlu0 1
    %1581 = vperm.xlu0 %1580, %v1283
    %v1582 = vpop.permute.xlu0 %1581
    %1584 = vset.pattern.permute.xlu0 1
    %1585 = vperm.xlu0 %1584, %v1285
    %v1586 = vpop.permute.xlu0 %1585
    %v1588 = vperm.slane %v1540, 0
    %v1589 = vadd.f32 %v1558, %v1588
    %v1590 = vadd.f32 %v1562, %v1588
    %v1591 = vadd.f32 %v1566, %v1588
    %v1592 = vadd.f32 %v1570, %v1588
    %v1593 = vadd.f32 %v1574, %v1588
    %v1594 = vadd.f32 %v1578, %v1588
    %v1595 = vadd.f32 %v1582, %v1588
    %v1596 = vadd.f32 %v1586, %v1588
    %vm1597 = vcmp.gt.f32.partialorder %v1589, 0.0
    %vm1598 = vcmp.gt.f32.partialorder %v1590, 0.0
    %vm1599 = vcmp.gt.f32.partialorder %v1591, 0.0
    %vm1600 = vcmp.gt.f32.partialorder %v1592, 0.0
    %vm1601 = vcmp.gt.f32.partialorder %v1593, 0.0
    %vm1602 = vcmp.gt.f32.partialorder %v1594, 0.0
    %vm1603 = vcmp.gt.f32.partialorder %v1595, 0.0
    %vm1604 = vcmp.gt.f32.partialorder %v1596, 0.0
    %v1605 = vmul.f32 %v1589, 0.2
    %v1606 = vmul.f32 %v1590, 0.2
    %v1607 = vmul.f32 %v1591, 0.2
    %v1608 = vmul.f32 %v1592, 0.2
    %v1609 = vmul.f32 %v1593, 0.2
    %v1610 = vmul.f32 %v1594, 0.2
    %v1611 = vmul.f32 %v1595, 0.2
    %v1612 = vmul.f32 %v1596, 0.2
    %v1613 = vsel %vm1597, %v1589, %v1605
    %v1614 = vsel %vm1598, %v1590, %v1606
    %v1615 = vsel %vm1599, %v1591, %v1607
    %v1616 = vsel %vm1600, %v1592, %v1608
    %v1617 = vsel %vm1601, %v1593, %v1609
    %v1618 = vsel %vm1602, %v1594, %v1610
    %v1619 = vsel %vm1603, %v1595, %v1611
    %v1620 = vsel %vm1604, %v1596, %v1612
    %v1621 = vsel %vm362, %v1613, -1e+30
    %v1622 = vsel %vm363, %v1614, -1e+30
    %v1623 = vsel %vm364, %v1615, -1e+30
    %v1624 = vsel %vm365, %v1616, -1e+30
    %v1625 = vsel %vm366, %v1617, -1e+30
    %v1626 = vsel %vm367, %v1618, -1e+30
    %v1627 = vsel %vm368, %v1619, -1e+30
    %v1628 = vsel %vm369, %v1620, -1e+30
    %v1629 = vsel %vm204, %v1621, -inf
    %1630 = vmax.xlane.f32.xlu0 %v1629
    %v1631 = vpop.xlane.xlu0 %1630
    %v1632 = vsel %vm204, %v1622, -inf
    %1633 = vmax.xlane.f32.xlu0 %v1632
    %v1634 = vpop.xlane.xlu0 %1633
    %v1635 = vsel %vm204, %v1623, -inf
    %1636 = vmax.xlane.f32.xlu0 %v1635
    %v1637 = vpop.xlane.xlu0 %1636
    %v1638 = vsel %vm204, %v1624, -inf
    %1639 = vmax.xlane.f32.xlu0 %v1638
    %v1640 = vpop.xlane.xlu0 %1639
    %v1641 = vsel %vm204, %v1625, -inf
    %1642 = vmax.xlane.f32.xlu0 %v1641
    %v1643 = vpop.xlane.xlu0 %1642
    %v1644 = vsel %vm204, %v1626, -inf
    %1645 = vmax.xlane.f32.xlu0 %v1644
    %v1646 = vpop.xlane.xlu0 %1645
    %v1647 = vsel %vm204, %v1627, -inf
    %1648 = vmax.xlane.f32.xlu0 %v1647
    %v1649 = vpop.xlane.xlu0 %1648
    %v1650 = vsel %vm204, %v1628, -inf
    %1651 = vmax.xlane.f32.xlu0 %v1650
    %v1652 = vpop.xlane.xlu0 %1651
    %v1653 = vsub.f32 %v1621, %v1631
    %v1654 = vsub.f32 %v1622, %v1634
    %v1655 = vsub.f32 %v1623, %v1637
    %v1656 = vsub.f32 %v1624, %v1640
    %v1657 = vsub.f32 %v1625, %v1643
    %v1658 = vsub.f32 %v1626, %v1646
    %v1659 = vsub.f32 %v1627, %v1649
    %v1660 = vsub.f32 %v1628, %v1652
    %v1661 = vmul.f32 %v1653, 1.442695
    %v1662 = vpow.pop %v1661
    %v1663 = vmul.f32 %v1654, 1.442695
    %v1664 = vpow.pop %v1663
    %v1665 = vmul.f32 %v1655, 1.442695
    %v1666 = vpow.pop %v1665
    %v1667 = vmul.f32 %v1656, 1.442695
    %v1668 = vpow.pop %v1667
    %v1669 = vmul.f32 %v1657, 1.442695
    %v1670 = vpow.pop %v1669
    %v1671 = vmul.f32 %v1658, 1.442695
    %v1672 = vpow.pop %v1671
    %v1673 = vmul.f32 %v1659, 1.442695
    %v1674 = vpow.pop %v1673
    %v1675 = vmul.f32 %v1660, 1.442695
    %v1676 = vpow.pop %v1675
    %v1677 = vsel %vm204, %v1662, 0.0
    %1678 = vadd.xlane.f32.xlu0 %v1677
    %v1679 = vpop.xlane.xlu0 %1678
    %v1680 = vsel %vm204, %v1664, 0.0
    %1681 = vadd.xlane.f32.xlu0 %v1680
    %v1682 = vpop.xlane.xlu0 %1681
    %v1683 = vsel %vm204, %v1666, 0.0
    %1684 = vadd.xlane.f32.xlu0 %v1683
    %v1685 = vpop.xlane.xlu0 %1684
    %v1686 = vsel %vm204, %v1668, 0.0
    %1687 = vadd.xlane.f32.xlu0 %v1686
    %v1688 = vpop.xlane.xlu0 %1687
    %v1689 = vsel %vm204, %v1670, 0.0
    %1690 = vadd.xlane.f32.xlu0 %v1689
    %v1691 = vpop.xlane.xlu0 %1690
    %v1692 = vsel %vm204, %v1672, 0.0
    %1693 = vadd.xlane.f32.xlu0 %v1692
    %v1694 = vpop.xlane.xlu0 %1693
    %v1695 = vsel %vm204, %v1674, 0.0
    %1696 = vadd.xlane.f32.xlu0 %v1695
    %v1697 = vpop.xlane.xlu0 %1696
    %v1698 = vsel %vm204, %v1676, 0.0
    %1699 = vadd.xlane.f32.xlu0 %v1698
    %v1700 = vpop.xlane.xlu0 %1699
    %v1701 = vrcp.pop %v1679
    %v1702 = vrcp.pop %v1682
    %v1703 = vrcp.pop %v1685
    %v1704 = vrcp.pop %v1688
    %v1705 = vrcp.pop %v1691
    %v1706 = vrcp.pop %v1694
    %v1707 = vrcp.pop %v1697
    %v1708 = vrcp.pop %v1700
    %v1709 = vmul.f32 %v1662, %v1701
    %v1710 = vmul.f32 %v1664, %v1702
    %v1711 = vmul.f32 %v1666, %v1703
    %v1712 = vmul.f32 %v1668, %v1704
    %v1713 = vmul.f32 %v1670, %v1705
    %v1714 = vmul.f32 %v1672, %v1706
    %v1715 = vmul.f32 %v1674, %v1707
    %v1716 = vmul.f32 %v1676, %v1708
    %v1717 = vpack.c.bf16 %v1710, %v1709
    %v1718 = vpack.c.bf16 %v1712, %v1711
    %v1719 = vpack.c.bf16 %v1714, %v1713
    %v1720 = vpack.c.bf16 %v1716, %v1715
    %1721 = vrot.lane.b32.xlu0 %v1109, 96
    %v1722 = vpop.permute.xlu0 %1721
    %1723 = vrot.lane.b32.xlu0 %v1110, 96
    %v1724 = vpop.permute.xlu0 %1723
    %1725 = vrot.lane.b32.xlu0 %v1111, 96
    %v1726 = vpop.permute.xlu0 %1725
    %1727 = vrot.lane.b32.xlu0 %v1112, 96
    %v1728 = vpop.permute.xlu0 %1727
    %v1734 = vsel %vm204, %v1717, 0
    %v1737 = vsel %vm204, %v1718, 0
    %v1740 = vsel %vm204, %v1719, 0
    %v1743 = vsel %vm204, %v1720, 0
    %1745 = vmatpush.bf16.msra.mxu0 0
    %1746 = vmatpush.bf16.msra.mxu0 0
    %1747 = vmatpush.bf16.msra.mxu0 0
    %1748 = vmatpush.bf16.msra.mxu0 0
    %1749 = vmatpush.bf16.msra.mxu0 %v1728
    %1750 = vmatpush.bf16.msra.mxu0 %v1726
    %1751 = vmatpush.bf16.msra.mxu0 %v1724
    %1752 = vmatpush.bf16.msra.mxu0 %v1722
    %1753 = vmatmul.bf16.gmra.mxu0 %v1734
    %v1754 = vpop.f32.mrf.mxu0
    %v1755 = vadd.f32 0.0, %v1754
    %v1756 = vpop.f32.mrf.mxu0
    %v1757 = vadd.f32 0.0, %v1756
    %1758 = vmatmul.bf16.gmra.mxu0 %v1737
    %v1759 = vpop.f32.mrf.mxu0
    %v1760 = vadd.f32 0.0, %v1759
    %v1761 = vpop.f32.mrf.mxu0
    %v1762 = vadd.f32 0.0, %v1761
    %1763 = vmatmul.bf16.gmra.mxu0 %v1740
    %v1764 = vpop.f32.mrf.mxu0
    %v1765 = vadd.f32 0.0, %v1764
    %v1766 = vpop.f32.mrf.mxu0
    %v1767 = vadd.f32 0.0, %v1766
    %1768 = vmatmul.bf16.gmra.mxu0 %v1743
    %v1769 = vpop.f32.mrf.mxu0
    %v1770 = vadd.f32 0.0, %v1769
    %v1771 = vpop.f32.mrf.mxu0
    %v1772 = vadd.f32 0.0, %v1771
    %1773 = vdwg.mxu0
    %v1775 = vsel %vm204, %v1488, 0
    %v1778 = vsel %vm204, %v1489, 0
    %v1781 = vsel %vm204, %v1490, 0
    %v1784 = vsel %vm204, %v1491, 0
    %1786 = vmatpush.bf16.msra.mxu0 0
    %1787 = vmatpush.bf16.msra.mxu0 0
    %1788 = vmatpush.bf16.msra.mxu0 0
    %1789 = vmatpush.bf16.msra.mxu0 0
    %1790 = vmatpush.bf16.msra.mxu0 %v1112
    %1791 = vmatpush.bf16.msra.mxu0 %v1111
    %1792 = vmatpush.bf16.msra.mxu0 %v1110
    %1793 = vmatpush.bf16.msra.mxu0 %v1109
    %1794 = vmatmul.bf16.gmra.mxu0 %v1775
    %v1795 = vpop.f32.mrf.mxu0
    %v1796 = vadd.f32 %v1755, %v1795
    %v1797 = vpop.f32.mrf.mxu0
    %v1798 = vadd.f32 %v1757, %v1797
    %1799 = vmatmul.bf16.gmra.mxu0 %v1778
    %v1800 = vpop.f32.mrf.mxu0
    %v1801 = vadd.f32 %v1760, %v1800
    %v1802 = vpop.f32.mrf.mxu0
    %v1803 = vadd.f32 %v1762, %v1802
    %1804 = vmatmul.bf16.gmra.mxu0 %v1781
    %v1805 = vpop.f32.mrf.mxu0
    %v1806 = vadd.f32 %v1765, %v1805
    %v1807 = vpop.f32.mrf.mxu0
    %v1808 = vadd.f32 %v1767, %v1807
    %1809 = vmatmul.bf16.gmra.mxu0 %v1784
    %v1810 = vpop.f32.mrf.mxu0
    %v1811 = vadd.f32 %v1770, %v1810
    %v1812 = vpop.f32.mrf.mxu0
    %v1813 = vadd.f32 %v1772, %v1812
    %1814 = vdwg.mxu0
    %1815 = vrot.lane.b32.xlu0 %v1175, 126
    %v1816 = vpop.permute.xlu0 %1815
    %1817 = vrot.lane.b32.xlu0 %v1177, 126
    %v1818 = vpop.permute.xlu0 %1817
    %1819 = vrot.lane.b32.xlu0 %v1180, 126
    %v1820 = vpop.permute.xlu0 %1819
    %1821 = vrot.lane.b32.xlu0 %v1182, 126
    %v1822 = vpop.permute.xlu0 %1821
    %1823 = vrot.lane.b32.xlu0 %v1185, 126
    %v1824 = vpop.permute.xlu0 %1823
    %1825 = vrot.lane.b32.xlu0 %v1187, 126
    %v1826 = vpop.permute.xlu0 %1825
    %1827 = vrot.lane.b32.xlu0 %v1190, 126
    %v1828 = vpop.permute.xlu0 %1827
    %1829 = vrot.lane.b32.xlu0 %v1192, 126
    %v1830 = vpop.permute.xlu0 %1829
    %1839 = vxpose.xlu0.b32.start [1/16] %v1816, 128
    %1840 = vxpose.xlu0.b32.cont [2/16] %v1818, 128
    %1841 = vxpose.xlu0.b32.cont [3/16] %v1820, 128
    %1842 = vxpose.xlu0.b32.cont [4/16] %v1822, 128
    %1843 = vxpose.xlu0.b32.cont [5/16] %v1824, 128
    %1844 = vxpose.xlu0.b32.cont [6/16] %v1826, 128
    %1845 = vxpose.xlu0.b32.cont [7/16] %v1828, 128
    %1846 = vxpose.xlu0.b32.cont [8/16] %v1830, 128
    %1847 = vxpose.xlu0.b32.cont [9/16] 0.0, 128
    %1848 = vxpose.xlu0.b32.cont [10/16] 0.0, 128
    %1849 = vxpose.xlu0.b32.cont [11/16] 0.0, 128
    %1850 = vxpose.xlu0.b32.cont [12/16] 0.0, 128
    %1851 = vxpose.xlu0.b32.cont [13/16] 0.0, 128
    %1852 = vxpose.xlu0.b32.cont [14/16] 0.0, 128
    %1853 = vxpose.xlu0.b32.cont [15/16] 0.0, 128
    %1854 = vxpose.xlu0.b32.end [16/16] 0.0, 128
    %v1855 = vpop.trf.xlu0
    %v1856 = vpop.trf.xlu0
    %v1857 = vpop.trf.xlu0
    %v1858 = vpop.trf.xlu0
    %v1859 = vpop.trf.xlu0
    %v1860 = vpop.trf.xlu0
    %v1861 = vpop.trf.xlu0
    %v1862 = vpop.trf.xlu0
    %v1863 = vpop.trf.xlu0
    %v1864 = vpop.trf.xlu0
    %v1865 = vpop.trf.xlu0
    %v1866 = vpop.trf.xlu0
    %v1867 = vpop.trf.xlu0
    %v1868 = vpop.trf.xlu0
    %v1869 = vpop.trf.xlu0
    %v1870 = vpop.trf.xlu0
    %1871 = vset.pattern.permute.xlu0 2
    %1872 = vperm.xlu0 %1871, %v1268
    %v1873 = vpop.permute.xlu0 %1872
    %1875 = vset.pattern.permute.xlu0 2
    %1876 = vperm.xlu0 %1875, %v1270
    %v1877 = vpop.permute.xlu0 %1876
    %1879 = vset.pattern.permute.xlu0 2
    %1880 = vperm.xlu0 %1879, %v1273
    %v1881 = vpop.permute.xlu0 %1880
    %1883 = vset.pattern.permute.xlu0 2
    %1884 = vperm.xlu0 %1883, %v1275
    %v1885 = vpop.permute.xlu0 %1884
    %1887 = vset.pattern.permute.xlu0 2
    %1888 = vperm.xlu0 %1887, %v1278
    %v1889 = vpop.permute.xlu0 %1888
    %1891 = vset.pattern.permute.xlu0 2
    %1892 = vperm.xlu0 %1891, %v1280
    %v1893 = vpop.permute.xlu0 %1892
    %1895 = vset.pattern.permute.xlu0 2
    %1896 = vperm.xlu0 %1895, %v1283
    %v1897 = vpop.permute.xlu0 %1896
    %1899 = vset.pattern.permute.xlu0 2
    %1900 = vperm.xlu0 %1899, %v1285
    %v1901 = vpop.permute.xlu0 %1900
    %v1903 = vperm.slane %v1855, 0
    %v1904 = vadd.f32 %v1873, %v1903
    %v1905 = vadd.f32 %v1877, %v1903
    %v1906 = vadd.f32 %v1881, %v1903
    %v1907 = vadd.f32 %v1885, %v1903
    %v1908 = vadd.f32 %v1889, %v1903
    %v1909 = vadd.f32 %v1893, %v1903
    %v1910 = vadd.f32 %v1897, %v1903
    %v1911 = vadd.f32 %v1901, %v1903
    %vm1912 = vcmp.gt.f32.partialorder %v1904, 0.0
    %vm1913 = vcmp.gt.f32.partialorder %v1905, 0.0
    %vm1914 = vcmp.gt.f32.partialorder %v1906, 0.0
    %vm1915 = vcmp.gt.f32.partialorder %v1907, 0.0
    %vm1916 = vcmp.gt.f32.partialorder %v1908, 0.0
    %vm1917 = vcmp.gt.f32.partialorder %v1909, 0.0
    %vm1918 = vcmp.gt.f32.partialorder %v1910, 0.0
    %vm1919 = vcmp.gt.f32.partialorder %v1911, 0.0
    %v1920 = vmul.f32 %v1904, 0.2
    %v1921 = vmul.f32 %v1905, 0.2
    %v1922 = vmul.f32 %v1906, 0.2
    %v1923 = vmul.f32 %v1907, 0.2
    %v1924 = vmul.f32 %v1908, 0.2
    %v1925 = vmul.f32 %v1909, 0.2
    %v1926 = vmul.f32 %v1910, 0.2
    %v1927 = vmul.f32 %v1911, 0.2
    %v1928 = vsel %vm1912, %v1904, %v1920
    %v1929 = vsel %vm1913, %v1905, %v1921
    %v1930 = vsel %vm1914, %v1906, %v1922
    %v1931 = vsel %vm1915, %v1907, %v1923
    %v1932 = vsel %vm1916, %v1908, %v1924
    %v1933 = vsel %vm1917, %v1909, %v1925
    %v1934 = vsel %vm1918, %v1910, %v1926
    %v1935 = vsel %vm1919, %v1911, %v1927
    %v1936 = vsel %vm362, %v1928, -1e+30
    %v1937 = vsel %vm363, %v1929, -1e+30
    %v1938 = vsel %vm364, %v1930, -1e+30
    %v1939 = vsel %vm365, %v1931, -1e+30
    %v1940 = vsel %vm366, %v1932, -1e+30
    %v1941 = vsel %vm367, %v1933, -1e+30
    %v1942 = vsel %vm368, %v1934, -1e+30
    %v1943 = vsel %vm369, %v1935, -1e+30
    %v1944 = vsel %vm204, %v1936, -inf
    %1945 = vmax.xlane.f32.xlu0 %v1944
    %v1946 = vpop.xlane.xlu0 %1945
    %v1947 = vsel %vm204, %v1937, -inf
    %1948 = vmax.xlane.f32.xlu0 %v1947
    %v1949 = vpop.xlane.xlu0 %1948
    %v1950 = vsel %vm204, %v1938, -inf
    %1951 = vmax.xlane.f32.xlu0 %v1950
    %v1952 = vpop.xlane.xlu0 %1951
    %v1953 = vsel %vm204, %v1939, -inf
    %1954 = vmax.xlane.f32.xlu0 %v1953
    %v1955 = vpop.xlane.xlu0 %1954
    %v1956 = vsel %vm204, %v1940, -inf
    %1957 = vmax.xlane.f32.xlu0 %v1956
    %v1958 = vpop.xlane.xlu0 %1957
    %v1959 = vsel %vm204, %v1941, -inf
    %1960 = vmax.xlane.f32.xlu0 %v1959
    %v1961 = vpop.xlane.xlu0 %1960
    %v1962 = vsel %vm204, %v1942, -inf
    %1963 = vmax.xlane.f32.xlu0 %v1962
    %v1964 = vpop.xlane.xlu0 %1963
    %v1965 = vsel %vm204, %v1943, -inf
    %1966 = vmax.xlane.f32.xlu0 %v1965
    %v1967 = vpop.xlane.xlu0 %1966
    %v1968 = vsub.f32 %v1936, %v1946
    %v1969 = vsub.f32 %v1937, %v1949
    %v1970 = vsub.f32 %v1938, %v1952
    %v1971 = vsub.f32 %v1939, %v1955
    %v1972 = vsub.f32 %v1940, %v1958
    %v1973 = vsub.f32 %v1941, %v1961
    %v1974 = vsub.f32 %v1942, %v1964
    %v1975 = vsub.f32 %v1943, %v1967
    %v1976 = vmul.f32 %v1968, 1.442695
    %v1977 = vpow.pop %v1976
    %v1978 = vmul.f32 %v1969, 1.442695
    %v1979 = vpow.pop %v1978
    %v1980 = vmul.f32 %v1970, 1.442695
    %v1981 = vpow.pop %v1980
    %v1982 = vmul.f32 %v1971, 1.442695
    %v1983 = vpow.pop %v1982
    %v1984 = vmul.f32 %v1972, 1.442695
    %v1985 = vpow.pop %v1984
    %v1986 = vmul.f32 %v1973, 1.442695
    %v1987 = vpow.pop %v1986
    %v1988 = vmul.f32 %v1974, 1.442695
    %v1989 = vpow.pop %v1988
    %v1990 = vmul.f32 %v1975, 1.442695
    %v1991 = vpow.pop %v1990
    %v1992 = vsel %vm204, %v1977, 0.0
    %1993 = vadd.xlane.f32.xlu0 %v1992
    %v1994 = vpop.xlane.xlu0 %1993
    %v1995 = vsel %vm204, %v1979, 0.0
    %1996 = vadd.xlane.f32.xlu0 %v1995
    %v1997 = vpop.xlane.xlu0 %1996
    %v1998 = vsel %vm204, %v1981, 0.0
    %1999 = vadd.xlane.f32.xlu0 %v1998
    %v2000 = vpop.xlane.xlu0 %1999
    %v2001 = vsel %vm204, %v1983, 0.0
    %2002 = vadd.xlane.f32.xlu0 %v2001
    %v2003 = vpop.xlane.xlu0 %2002
    %v2004 = vsel %vm204, %v1985, 0.0
    %2005 = vadd.xlane.f32.xlu0 %v2004
    %v2006 = vpop.xlane.xlu0 %2005
    %v2007 = vsel %vm204, %v1987, 0.0
    %2008 = vadd.xlane.f32.xlu0 %v2007
    %v2009 = vpop.xlane.xlu0 %2008
    %v2010 = vsel %vm204, %v1989, 0.0
    %2011 = vadd.xlane.f32.xlu0 %v2010
    %v2012 = vpop.xlane.xlu0 %2011
    %v2013 = vsel %vm204, %v1991, 0.0
    %2014 = vadd.xlane.f32.xlu0 %v2013
    %v2015 = vpop.xlane.xlu0 %2014
    %v2016 = vrcp.pop %v1994
    %v2017 = vrcp.pop %v1997
    %v2018 = vrcp.pop %v2000
    %v2019 = vrcp.pop %v2003
    %v2020 = vrcp.pop %v2006
    %v2021 = vrcp.pop %v2009
    %v2022 = vrcp.pop %v2012
    %v2023 = vrcp.pop %v2015
    %v2024 = vmul.f32 %v1977, %v2016
    %v2025 = vmul.f32 %v1979, %v2017
    %v2026 = vmul.f32 %v1981, %v2018
    %v2027 = vmul.f32 %v1983, %v2019
    %v2028 = vmul.f32 %v1985, %v2020
    %v2029 = vmul.f32 %v1987, %v2021
    %v2030 = vmul.f32 %v1989, %v2022
    %v2031 = vmul.f32 %v1991, %v2023
    %v2032 = vpack.c.bf16 %v2025, %v2024
    %v2033 = vpack.c.bf16 %v2027, %v2026
    %v2034 = vpack.c.bf16 %v2029, %v2028
    %v2035 = vpack.c.bf16 %v2031, %v2030
    %2036 = vrot.lane.b32.xlu0 %v1109, 64
    %v2037 = vpop.permute.xlu0 %2036
    %2038 = vrot.lane.b32.xlu0 %v1110, 64
    %v2039 = vpop.permute.xlu0 %2038
    %2040 = vrot.lane.b32.xlu0 %v1111, 64
    %v2041 = vpop.permute.xlu0 %2040
    %2042 = vrot.lane.b32.xlu0 %v1112, 64
    %v2043 = vpop.permute.xlu0 %2042
    %v2049 = vsel %vm204, %v2032, 0
    %v2052 = vsel %vm204, %v2033, 0
    %v2055 = vsel %vm204, %v2034, 0
    %v2058 = vsel %vm204, %v2035, 0
    %2060 = vmatpush.bf16.msra.mxu0 0
    %2061 = vmatpush.bf16.msra.mxu0 0
    %2062 = vmatpush.bf16.msra.mxu0 0
    %2063 = vmatpush.bf16.msra.mxu0 0
    %2064 = vmatpush.bf16.msra.mxu0 %v2043
    %2065 = vmatpush.bf16.msra.mxu0 %v2041
    %2066 = vmatpush.bf16.msra.mxu0 %v2039
    %2067 = vmatpush.bf16.msra.mxu0 %v2037
    %2068 = vmatmul.bf16.gmra.mxu0 %v2049
    %v2069 = vpop.f32.mrf.mxu0
    %v2070 = vadd.f32 0.0, %v2069
    %v2071 = vpop.f32.mrf.mxu0
    %v2072 = vadd.f32 0.0, %v2071
    %2073 = vmatmul.bf16.gmra.mxu0 %v2052
    %v2074 = vpop.f32.mrf.mxu0
    %v2075 = vadd.f32 0.0, %v2074
    %v2076 = vpop.f32.mrf.mxu0
    %v2077 = vadd.f32 0.0, %v2076
    %2078 = vmatmul.bf16.gmra.mxu0 %v2055
    %v2079 = vpop.f32.mrf.mxu0
    %v2080 = vadd.f32 0.0, %v2079
    %v2081 = vpop.f32.mrf.mxu0
    %v2082 = vadd.f32 0.0, %v2081
    %2083 = vmatmul.bf16.gmra.mxu0 %v2058
    %v2084 = vpop.f32.mrf.mxu0
    %v2085 = vadd.f32 0.0, %v2084
    %v2086 = vpop.f32.mrf.mxu0
    %v2087 = vadd.f32 0.0, %v2086
    %2088 = vdwg.mxu0
    %v2089 = vadd.f32 %v1796, %v2070
    %v2090 = vadd.f32 %v1798, %v2072
    %v2091 = vadd.f32 %v1801, %v2075
    %v2092 = vadd.f32 %v1803, %v2077
    %v2093 = vadd.f32 %v1806, %v2080
    %v2094 = vadd.f32 %v1808, %v2082
    %v2095 = vadd.f32 %v1811, %v2085
    %v2096 = vadd.f32 %v1813, %v2087
    %2097 = vrot.lane.b32.xlu0 %v1175, 125
    %v2098 = vpop.permute.xlu0 %2097
    %2099 = vrot.lane.b32.xlu0 %v1177, 125
    %v2100 = vpop.permute.xlu0 %2099
    %2101 = vrot.lane.b32.xlu0 %v1180, 125
    %v2102 = vpop.permute.xlu0 %2101
    %2103 = vrot.lane.b32.xlu0 %v1182, 125
    %v2104 = vpop.permute.xlu0 %2103
    %2105 = vrot.lane.b32.xlu0 %v1185, 125
    %v2106 = vpop.permute.xlu0 %2105
    %2107 = vrot.lane.b32.xlu0 %v1187, 125
    %v2108 = vpop.permute.xlu0 %2107
    %2109 = vrot.lane.b32.xlu0 %v1190, 125
    %v2110 = vpop.permute.xlu0 %2109
    %2111 = vrot.lane.b32.xlu0 %v1192, 125
    %v2112 = vpop.permute.xlu0 %2111
    %2121 = vxpose.xlu0.b32.start [1/16] %v2098, 128
    %2122 = vxpose.xlu0.b32.cont [2/16] %v2100, 128
    %2123 = vxpose.xlu0.b32.cont [3/16] %v2102, 128
    %2124 = vxpose.xlu0.b32.cont [4/16] %v2104, 128
    %2125 = vxpose.xlu0.b32.cont [5/16] %v2106, 128
    %2126 = vxpose.xlu0.b32.cont [6/16] %v2108, 128
    %2127 = vxpose.xlu0.b32.cont [7/16] %v2110, 128
    %2128 = vxpose.xlu0.b32.cont [8/16] %v2112, 128
    %2129 = vxpose.xlu0.b32.cont [9/16] 0.0, 128
    %2130 = vxpose.xlu0.b32.cont [10/16] 0.0, 128
    %2131 = vxpose.xlu0.b32.cont [11/16] 0.0, 128
    %2132 = vxpose.xlu0.b32.cont [12/16] 0.0, 128
    %2133 = vxpose.xlu0.b32.cont [13/16] 0.0, 128
    %2134 = vxpose.xlu0.b32.cont [14/16] 0.0, 128
    %2135 = vxpose.xlu0.b32.cont [15/16] 0.0, 128
    %2136 = vxpose.xlu0.b32.end [16/16] 0.0, 128
    %v2137 = vpop.trf.xlu0
    %v2138 = vpop.trf.xlu0
    %v2139 = vpop.trf.xlu0
    %v2140 = vpop.trf.xlu0
    %v2141 = vpop.trf.xlu0
    %v2142 = vpop.trf.xlu0
    %v2143 = vpop.trf.xlu0
    %v2144 = vpop.trf.xlu0
    %v2145 = vpop.trf.xlu0
    %v2146 = vpop.trf.xlu0
    %v2147 = vpop.trf.xlu0
    %v2148 = vpop.trf.xlu0
    %v2149 = vpop.trf.xlu0
    %v2150 = vpop.trf.xlu0
    %v2151 = vpop.trf.xlu0
    %v2152 = vpop.trf.xlu0
    %2153 = vset.pattern.permute.xlu0 3
    %2154 = vperm.xlu0 %2153, %v1268
    %v2155 = vpop.permute.xlu0 %2154
    %2157 = vset.pattern.permute.xlu0 3
    %2158 = vperm.xlu0 %2157, %v1270
    %v2159 = vpop.permute.xlu0 %2158
    %2161 = vset.pattern.permute.xlu0 3
    %2162 = vperm.xlu0 %2161, %v1273
    %v2163 = vpop.permute.xlu0 %2162
    %2165 = vset.pattern.permute.xlu0 3
    %2166 = vperm.xlu0 %2165, %v1275
    %v2167 = vpop.permute.xlu0 %2166
    %2169 = vset.pattern.permute.xlu0 3
    %2170 = vperm.xlu0 %2169, %v1278
    %v2171 = vpop.permute.xlu0 %2170
    %2173 = vset.pattern.permute.xlu0 3
    %2174 = vperm.xlu0 %2173, %v1280
    %v2175 = vpop.permute.xlu0 %2174
    %2177 = vset.pattern.permute.xlu0 3
    %2178 = vperm.xlu0 %2177, %v1283
    %v2179 = vpop.permute.xlu0 %2178
    %2181 = vset.pattern.permute.xlu0 3
    %2182 = vperm.xlu0 %2181, %v1285
    %v2183 = vpop.permute.xlu0 %2182
    %v2185 = vperm.slane %v2137, 0
    %v2186 = vadd.f32 %v2155, %v2185
    %v2187 = vadd.f32 %v2159, %v2185
    %v2188 = vadd.f32 %v2163, %v2185
    %v2189 = vadd.f32 %v2167, %v2185
    %v2190 = vadd.f32 %v2171, %v2185
    %v2191 = vadd.f32 %v2175, %v2185
    %v2192 = vadd.f32 %v2179, %v2185
    %v2193 = vadd.f32 %v2183, %v2185
    %vm2194 = vcmp.gt.f32.partialorder %v2186, 0.0
    %vm2195 = vcmp.gt.f32.partialorder %v2187, 0.0
    %vm2196 = vcmp.gt.f32.partialorder %v2188, 0.0
    %vm2197 = vcmp.gt.f32.partialorder %v2189, 0.0
    %vm2198 = vcmp.gt.f32.partialorder %v2190, 0.0
    %vm2199 = vcmp.gt.f32.partialorder %v2191, 0.0
    %vm2200 = vcmp.gt.f32.partialorder %v2192, 0.0
    %vm2201 = vcmp.gt.f32.partialorder %v2193, 0.0
    %v2202 = vmul.f32 %v2186, 0.2
    %v2203 = vmul.f32 %v2187, 0.2
    %v2204 = vmul.f32 %v2188, 0.2
    %v2205 = vmul.f32 %v2189, 0.2
    %v2206 = vmul.f32 %v2190, 0.2
    %v2207 = vmul.f32 %v2191, 0.2
    %v2208 = vmul.f32 %v2192, 0.2
    %v2209 = vmul.f32 %v2193, 0.2
    %v2210 = vsel %vm2194, %v2186, %v2202
    %v2211 = vsel %vm2195, %v2187, %v2203
    %v2212 = vsel %vm2196, %v2188, %v2204
    %v2213 = vsel %vm2197, %v2189, %v2205
    %v2214 = vsel %vm2198, %v2190, %v2206
    %v2215 = vsel %vm2199, %v2191, %v2207
    %v2216 = vsel %vm2200, %v2192, %v2208
    %v2217 = vsel %vm2201, %v2193, %v2209
    %v2218 = vsel %vm362, %v2210, -1e+30
    %v2219 = vsel %vm363, %v2211, -1e+30
    %v2220 = vsel %vm364, %v2212, -1e+30
    %v2221 = vsel %vm365, %v2213, -1e+30
    %v2222 = vsel %vm366, %v2214, -1e+30
    %v2223 = vsel %vm367, %v2215, -1e+30
    %v2224 = vsel %vm368, %v2216, -1e+30
    %v2225 = vsel %vm369, %v2217, -1e+30
    %v2226 = vsel %vm204, %v2218, -inf
    %2227 = vmax.xlane.f32.xlu0 %v2226
    %v2228 = vpop.xlane.xlu0 %2227
    %v2229 = vsel %vm204, %v2219, -inf
    %2230 = vmax.xlane.f32.xlu0 %v2229
    %v2231 = vpop.xlane.xlu0 %2230
    %v2232 = vsel %vm204, %v2220, -inf
    %2233 = vmax.xlane.f32.xlu0 %v2232
    %v2234 = vpop.xlane.xlu0 %2233
    %v2235 = vsel %vm204, %v2221, -inf
    %2236 = vmax.xlane.f32.xlu0 %v2235
    %v2237 = vpop.xlane.xlu0 %2236
    %v2238 = vsel %vm204, %v2222, -inf
    %2239 = vmax.xlane.f32.xlu0 %v2238
    %v2240 = vpop.xlane.xlu0 %2239
    %v2241 = vsel %vm204, %v2223, -inf
    %2242 = vmax.xlane.f32.xlu0 %v2241
    %v2243 = vpop.xlane.xlu0 %2242
    %v2244 = vsel %vm204, %v2224, -inf
    %2245 = vmax.xlane.f32.xlu0 %v2244
    %v2246 = vpop.xlane.xlu0 %2245
    %v2247 = vsel %vm204, %v2225, -inf
    %2248 = vmax.xlane.f32.xlu0 %v2247
    %v2249 = vpop.xlane.xlu0 %2248
    %v2250 = vsub.f32 %v2218, %v2228
    %v2251 = vsub.f32 %v2219, %v2231
    %v2252 = vsub.f32 %v2220, %v2234
    %v2253 = vsub.f32 %v2221, %v2237
    %v2254 = vsub.f32 %v2222, %v2240
    %v2255 = vsub.f32 %v2223, %v2243
    %v2256 = vsub.f32 %v2224, %v2246
    %v2257 = vsub.f32 %v2225, %v2249
    %v2258 = vmul.f32 %v2250, 1.442695
    %v2259 = vpow.pop %v2258
    %v2260 = vmul.f32 %v2251, 1.442695
    %v2261 = vpow.pop %v2260
    %v2262 = vmul.f32 %v2252, 1.442695
    %v2263 = vpow.pop %v2262
    %v2264 = vmul.f32 %v2253, 1.442695
    %v2265 = vpow.pop %v2264
    %v2266 = vmul.f32 %v2254, 1.442695
    %v2267 = vpow.pop %v2266
    %v2268 = vmul.f32 %v2255, 1.442695
    %v2269 = vpow.pop %v2268
    %v2270 = vmul.f32 %v2256, 1.442695
    %v2271 = vpow.pop %v2270
    %v2272 = vmul.f32 %v2257, 1.442695
    %v2273 = vpow.pop %v2272
    %v2274 = vsel %vm204, %v2259, 0.0
    %2275 = vadd.xlane.f32.xlu0 %v2274
    %v2276 = vpop.xlane.xlu0 %2275
    %v2277 = vsel %vm204, %v2261, 0.0
    %2278 = vadd.xlane.f32.xlu0 %v2277
    %v2279 = vpop.xlane.xlu0 %2278
    %v2280 = vsel %vm204, %v2263, 0.0
    %2281 = vadd.xlane.f32.xlu0 %v2280
    %v2282 = vpop.xlane.xlu0 %2281
    %v2283 = vsel %vm204, %v2265, 0.0
    %2284 = vadd.xlane.f32.xlu0 %v2283
    %v2285 = vpop.xlane.xlu0 %2284
    %v2286 = vsel %vm204, %v2267, 0.0
    %2287 = vadd.xlane.f32.xlu0 %v2286
    %v2288 = vpop.xlane.xlu0 %2287
    %v2289 = vsel %vm204, %v2269, 0.0
    %2290 = vadd.xlane.f32.xlu0 %v2289
    %v2291 = vpop.xlane.xlu0 %2290
    %v2292 = vsel %vm204, %v2271, 0.0
    %2293 = vadd.xlane.f32.xlu0 %v2292
    %v2294 = vpop.xlane.xlu0 %2293
    %v2295 = vsel %vm204, %v2273, 0.0
    %2296 = vadd.xlane.f32.xlu0 %v2295
    %v2297 = vpop.xlane.xlu0 %2296
    %v2298 = vrcp.pop %v2276
    %v2299 = vrcp.pop %v2279
    %v2300 = vrcp.pop %v2282
    %v2301 = vrcp.pop %v2285
    %v2302 = vrcp.pop %v2288
    %v2303 = vrcp.pop %v2291
    %v2304 = vrcp.pop %v2294
    %v2305 = vrcp.pop %v2297
    %v2306 = vmul.f32 %v2259, %v2298
    %v2307 = vmul.f32 %v2261, %v2299
    %v2308 = vmul.f32 %v2263, %v2300
    %v2309 = vmul.f32 %v2265, %v2301
    %v2310 = vmul.f32 %v2267, %v2302
    %v2311 = vmul.f32 %v2269, %v2303
    %v2312 = vmul.f32 %v2271, %v2304
    %v2313 = vmul.f32 %v2273, %v2305
    %v2314 = vpack.c.bf16 %v2307, %v2306
    %v2315 = vpack.c.bf16 %v2309, %v2308
    %v2316 = vpack.c.bf16 %v2311, %v2310
    %v2317 = vpack.c.bf16 %v2313, %v2312
    %2318 = vrot.lane.b32.xlu0 %v1109, 32
    %v2319 = vpop.permute.xlu0 %2318
    %2320 = vrot.lane.b32.xlu0 %v1110, 32
    %v2321 = vpop.permute.xlu0 %2320
    %2322 = vrot.lane.b32.xlu0 %v1111, 32
    %v2323 = vpop.permute.xlu0 %2322
    %2324 = vrot.lane.b32.xlu0 %v1112, 32
    %v2325 = vpop.permute.xlu0 %2324
    %v2331 = vsel %vm204, %v2314, 0
    %v2334 = vsel %vm204, %v2315, 0
    %v2337 = vsel %vm204, %v2316, 0
    %v2340 = vsel %vm204, %v2317, 0
    %2342 = vmatpush.bf16.msra.mxu0 0
    %2343 = vmatpush.bf16.msra.mxu0 0
    %2344 = vmatpush.bf16.msra.mxu0 0
    %2345 = vmatpush.bf16.msra.mxu0 0
    %2346 = vmatpush.bf16.msra.mxu0 %v2325
    %2347 = vmatpush.bf16.msra.mxu0 %v2323
    %2348 = vmatpush.bf16.msra.mxu0 %v2321
    %2349 = vmatpush.bf16.msra.mxu0 %v2319
    %2350 = vmatmul.bf16.gmra.mxu0 %v2331
    %v2351 = vpop.f32.mrf.mxu0
    %v2352 = vadd.f32 0.0, %v2351
    %v2353 = vpop.f32.mrf.mxu0
    %v2354 = vadd.f32 0.0, %v2353
    %2355 = vmatmul.bf16.gmra.mxu0 %v2334
    %v2356 = vpop.f32.mrf.mxu0
    %v2357 = vadd.f32 0.0, %v2356
    %v2358 = vpop.f32.mrf.mxu0
    %v2359 = vadd.f32 0.0, %v2358
    %2360 = vmatmul.bf16.gmra.mxu0 %v2337
    %v2361 = vpop.f32.mrf.mxu0
    %v2362 = vadd.f32 0.0, %v2361
    %v2363 = vpop.f32.mrf.mxu0
    %v2364 = vadd.f32 0.0, %v2363
    %2365 = vmatmul.bf16.gmra.mxu0 %v2340
    %v2366 = vpop.f32.mrf.mxu0
    %v2367 = vadd.f32 0.0, %v2366
    %v2368 = vpop.f32.mrf.mxu0
    %v2369 = vadd.f32 0.0, %v2368
    %2370 = vdwg.mxu0
    %v2371 = vadd.f32 %v2089, %v2352
    %v2372 = vadd.f32 %v2090, %v2354
    %v2373 = vadd.f32 %v2091, %v2357
    %v2374 = vadd.f32 %v2092, %v2359
    %v2375 = vadd.f32 %v2093, %v2362
    %v2376 = vadd.f32 %v2094, %v2364
    %v2377 = vadd.f32 %v2095, %v2367
    %v2378 = vadd.f32 %v2096, %v2369
    %v2379 = vmul.f32 %v2371, 0.25
    %v2380 = vmul.f32 %v2372, 0.25
    %v2381 = vmul.f32 %v2373, 0.25
    %v2382 = vmul.f32 %v2374, 0.25
    %v2383 = vmul.f32 %v2375, 0.25
    %v2384 = vmul.f32 %v2376, 0.25
    %v2385 = vmul.f32 %v2377, 0.25
    %v2386 = vmul.f32 %v2378, 0.25
    %v2387 = vld [vmem:[%s18] sm:$0x1]
    %v2389 = vperm.slane %v2387, 0
    %v2391 = vadd.f32 %v2379, %v2389
    %v2392 = vadd.f32 %v2380, %v2389
    %v2393 = vadd.f32 %v2381, %v2389
    %v2394 = vadd.f32 %v2382, %v2389
    %v2395 = vadd.f32 %v2383, %v2389
    %v2396 = vadd.f32 %v2384, %v2389
    %v2397 = vadd.f32 %v2385, %v2389
    %v2398 = vadd.f32 %v2386, %v2389
    %v2399 = vsel %vm687, %v2391, 0.0
    %v2400 = vsel %vm687, %v2392, 0.0
    %v2401 = vadd.f32 %v2399, %v2400
    %v2402 = vsel %vm687, %v2393, 0.0
    %v2403 = vadd.f32 %v2401, %v2402
    %v2404 = vsel %vm687, %v2394, 0.0
    %v2405 = vadd.f32 %v2403, %v2404
    %v2406 = vsel %vm687, %v2395, 0.0
    %v2407 = vadd.f32 %v2405, %v2406
    %v2408 = vsel %vm687, %v2396, 0.0
    %v2409 = vadd.f32 %v2407, %v2408
    %v2410 = vsel %vm687, %v2397, 0.0
    %v2411 = vadd.f32 %v2409, %v2410
    %v2412 = vsel %vm687, %v2398, 0.0
    %v2413 = vadd.f32 %v2411, %v2412
    %v2414 = vrot.slane %v2413, 4
    %v2415 = vadd.f32 %v2413, %v2414
    %v2416 = vrot.slane %v2415, 2
    %v2417 = vadd.f32 %v2415, %v2416
    %v2418 = vrot.slane %v2417, 1
    %v2419 = vadd.f32 %v2417, %v2418
    %v2420 = vmul.f32 %v2419, %v506
    %v2421 = vsub.f32 %v2391, %v2420
    %v2422 = vsub.f32 %v2392, %v2420
    %v2423 = vsub.f32 %v2393, %v2420
    %v2424 = vsub.f32 %v2394, %v2420
    %v2425 = vsub.f32 %v2395, %v2420
    %v2426 = vsub.f32 %v2396, %v2420
    %v2427 = vsub.f32 %v2397, %v2420
    %v2428 = vsub.f32 %v2398, %v2420
    %v2429 = vmul.f32 %v2421, %v2421
    %v2430 = vmul.f32 %v2422, %v2422
    %v2431 = vmul.f32 %v2423, %v2423
    %v2432 = vmul.f32 %v2424, %v2424
    %v2433 = vmul.f32 %v2425, %v2425
    %v2434 = vmul.f32 %v2426, %v2426
    %v2435 = vmul.f32 %v2427, %v2427
    %v2436 = vmul.f32 %v2428, %v2428
    %v2437 = vsel %vm687, %v2429, 0.0
    %v2438 = vsel %vm687, %v2430, 0.0
    %v2439 = vadd.f32 %v2437, %v2438
    %v2440 = vsel %vm687, %v2431, 0.0
    %v2441 = vadd.f32 %v2439, %v2440
    %v2442 = vsel %vm687, %v2432, 0.0
    %v2443 = vadd.f32 %v2441, %v2442
    %v2444 = vsel %vm687, %v2433, 0.0
    %v2445 = vadd.f32 %v2443, %v2444
    %v2446 = vsel %vm687, %v2434, 0.0
    %v2447 = vadd.f32 %v2445, %v2446
    %v2448 = vsel %vm687, %v2435, 0.0
    %v2449 = vadd.f32 %v2447, %v2448
    %v2450 = vsel %vm687, %v2436, 0.0
    %v2451 = vadd.f32 %v2449, %v2450
    %v2452 = vrot.slane %v2451, 4
    %v2453 = vadd.f32 %v2451, %v2452
    %v2454 = vrot.slane %v2453, 2
    %v2455 = vadd.f32 %v2453, %v2454
    %v2456 = vrot.slane %v2455, 1
    %v2457 = vadd.f32 %v2455, %v2456
    %v2458 = vmul.f32 %v2457, %v506
    %v2459 = vadd.f32 %v2458, 1e-05
    %v2460 = vrsqrt.pop %v2459
    %v2461 = vmul.f32 %v2460, %v2459
    %v2462 = vmul.f32 %v2461, %v2460
    %v2463 = vmul.f32 0.5, %v2462
    %v2464 = vsub.f32 1.5, %v2463
    %v2465 = vmul.f32 %v2460, %v2464
    %vm2466 = vweird.f32 %v2459
    %vm2467 = vweird.f32 %v2460
    %vm2468 = vmor %vm2466, %vm2467
    %v2469 = vsel %vm2468, %v2460, %v2465
    %v2470 = vmul.f32 %v2421, %v2469
    %v2471 = vmul.f32 %v2422, %v2469
    %v2472 = vmul.f32 %v2423, %v2469
    %v2473 = vmul.f32 %v2424, %v2469
    %v2474 = vmul.f32 %v2425, %v2469
    %v2475 = vmul.f32 %v2426, %v2469
    %v2476 = vmul.f32 %v2427, %v2469
    %v2477 = vmul.f32 %v2428, %v2469
    %v2478 = vld [vmem:[%s19] sm:$0x1]
    %v2480 = vperm.slane %v2478, 0
    %v2482 = vmul.f32 %v2470, %v2480
    %v2483 = vmul.f32 %v2471, %v2480
    %v2484 = vmul.f32 %v2472, %v2480
    %v2485 = vmul.f32 %v2473, %v2480
    %v2486 = vmul.f32 %v2474, %v2480
    %v2487 = vmul.f32 %v2475, %v2480
    %v2488 = vmul.f32 %v2476, %v2480
    %v2489 = vmul.f32 %v2477, %v2480
    %v2490 = vld [vmem:[%s20] sm:$0x1]
    %v2492 = vperm.slane %v2490, 0
    %v2494 = vadd.f32 %v2482, %v2492
    %v2495 = vadd.f32 %v2483, %v2492
    %v2496 = vadd.f32 %v2484, %v2492
    %v2497 = vadd.f32 %v2485, %v2492
    %v2498 = vadd.f32 %v2486, %v2492
    %v2499 = vadd.f32 %v2487, %v2492
    %v2500 = vadd.f32 %v2488, %v2492
    %v2501 = vadd.f32 %v2489, %v2492
    %v2502 = vmax.f32 %v2494, 0.0
    %v2503 = vmax.f32 %v2495, 0.0
    %v2504 = vmax.f32 %v2496, 0.0
    %v2505 = vmax.f32 %v2497, 0.0
    %v2506 = vmax.f32 %v2498, 0.0
    %v2507 = vmax.f32 %v2499, 0.0
    %v2508 = vmax.f32 %v2500, 0.0
    %v2509 = vmax.f32 %v2501, 0.0
    %v2510 = vld [vmem:[%s1] sm:$0x1]
    %v2511 = vperm.slane %v2510, 0
    %vm2512 = vcmp.eq.s32.totalorder %v77, %v2511
    %v2513 = vsel %vm2512, 1, 0
    %v2514 = vcvt.s32.f32 %v2513
    %vm2515 = vcmask 517120
    %v2516 = vsel %vm2515, %v2514, 0.0
    %2517 = vadd.xlane.f32.xlu0 %v2516
    %v2518 = vpop.xlane.xlu0 %2517
    %v2519 = vmax.f32 %v2518, 1.0
    %v2520 = vrcp.pop %v2519
    %v2521 = vmul.f32 %v2519, %v2520
    %v2522 = vsub.f32 1.0, %v2521
    %v2523 = vmul.f32 %v2520, %v2522
    %v2524 = vadd.f32 %v2520, %v2523
    %vm2525 = vweird.f32 %v2519
    %vm2526 = vweird.f32 %v2520
    %vm2527 = vmor %vm2525, %vm2526
    %v2528 = vsel %vm2527, %v2520, %v2524
    %v2529 = vand.u32 2147483647, %v2519
    %vm2530 = vcmp.eq.f32.partialorder %v2529, 8.507059e+37
    %v2531 = vand.u32 %v2519, 2147483648
    %v2532 = vor.u32 1.1754944e-38, %v2531
    %v2533 = vsel %vm2530, %v2532, %v2528
    %v2534 = vmul.f32 %v2514, %v2533
    %v2536 = vsel %vm204, %v2534, 0
    %2538 = vmatpush.msra.mxu0 0.0
    %2539 = vmatpush.msra.mxu0 0.0
    %2540 = vmatpush.msra.mxu0 0.0
    %2541 = vmatpush.msra.mxu0 0.0
    %2542 = vmatpush.msra.mxu0 0.0
    %2543 = vmatpush.msra.mxu0 0.0
    %2544 = vmatpush.msra.mxu0 0.0
    %2545 = vmatpush.msra.mxu0 0.0
    %2546 = vmatpush.msra.mxu0 %v2509
    %2547 = vmatpush.msra.mxu0 %v2508
    %2548 = vmatpush.msra.mxu0 %v2507
    %2549 = vmatpush.msra.mxu0 %v2506
    %2550 = vmatpush.msra.mxu0 %v2505
    %2551 = vmatpush.msra.mxu0 %v2504
    %2552 = vmatpush.msra.mxu0 %v2503
    %2553 = vmatpush.msra.mxu0 %v2502
    %2554 = vmatmul.f32.gmra.mxu0 %v2536
    %v2555 = vpop.f32.mrf.mxu0
    %v2556 = vadd.f32 0.0, %v2555
    %2557 = vdwg.mxu0
    %v2558 = vpack.c.bf16 %v2556, %v2556
    %v2559 = vld [vmem:[%s21] sm:$0xff]
    %v2560 = vld [vmem:[%s21 + $0x8] sm:$0xff]
    %v2561 = vld [vmem:[%s21 + $0x10] sm:$0xff]
    %v2562 = vld [vmem:[%s21 + $0x18] sm:$0xff]
    %v2563 = vld [vmem:[%s21 + $0x20] sm:$0xff]
    %v2564 = vld [vmem:[%s21 + $0x28] sm:$0xff]
    %v2565 = vld [vmem:[%s21 + $0x30] sm:$0xff]
    %v2566 = vld [vmem:[%s21 + $0x38] sm:$0xff]
    %v2567 = vld [vmem:[%s22] sm:$0xf]
    %v2569 = vperm.slane %v2567, 0
    %v2570 = vperm.slane %v2567, 1
    %v2571 = vperm.slane %v2567, 2
    %v2572 = vperm.slane %v2567, 3
    %v2585 = vunpack.c.l.b16 %v2559
    %v2586 = vunpack.c.h.b16 %v2559
    %v2587 = vunpack.c.l.b16 %v2560
    %v2588 = vunpack.c.h.b16 %v2560
    %v2589 = vunpack.c.l.b16 %v2561
    %v2590 = vunpack.c.h.b16 %v2561
    %v2591 = vunpack.c.l.b16 %v2562
    %v2592 = vunpack.c.h.b16 %v2562
    %v2593 = vunpack.c.l.b16 %v2563
    %v2594 = vunpack.c.h.b16 %v2563
    %v2595 = vunpack.c.l.b16 %v2564
    %v2596 = vunpack.c.h.b16 %v2564
    %v2597 = vunpack.c.l.b16 %v2565
    %v2598 = vunpack.c.h.b16 %v2565
    %v2599 = vunpack.c.l.b16 %v2566
    %v2600 = vunpack.c.h.b16 %v2566
    %v2601 = vpack.c.b16 %v2589, %v2585
    %v2602 = vpack.c.b16 %v2590, %v2586
    %v2603 = vpack.c.b16 %v2591, %v2587
    %v2604 = vpack.c.b16 %v2592, %v2588
    %v2605 = vpack.c.b16 %v2597, %v2593
    %v2606 = vpack.c.b16 %v2598, %v2594
    %v2607 = vpack.c.b16 %v2599, %v2595
    %v2608 = vpack.c.b16 %v2600, %v2596
    %v2618 = vsel %vm687, %v2558, 0
    %2620 = vmatpush.bf16.msra.mxu0 0
    %2621 = vmatpush.bf16.msra.mxu0 0
    %2622 = vmatpush.bf16.msra.mxu0 0
    %2623 = vmatpush.bf16.msra.mxu0 0
    %2624 = vmatpush.bf16.msra.mxu0 0
    %2625 = vmatpush.bf16.msra.mxu0 0
    %2626 = vmatpush.bf16.msra.mxu0 %v2605
    %2627 = vmatpush.bf16.msra.mxu0 %v2601
    %2628 = vmatmul.bf16.gmra.mxu0 %v2618
    %v2629 = vpop.f32.mrf.mxu0
    %v2630 = vadd.f32 %v2569, %v2629
    %v2631 = vpop.f32.mrf.mxu0
    %2632 = vdwg.mxu0
    %2633 = vmatpush.bf16.msra.mxu0 0
    %2634 = vmatpush.bf16.msra.mxu0 0
    %2635 = vmatpush.bf16.msra.mxu0 0
    %2636 = vmatpush.bf16.msra.mxu0 0
    %2637 = vmatpush.bf16.msra.mxu0 0
    %2638 = vmatpush.bf16.msra.mxu0 0
    %2639 = vmatpush.bf16.msra.mxu0 %v2606
    %2640 = vmatpush.bf16.msra.mxu0 %v2602
    %2641 = vmatmul.bf16.gmra.mxu0 %v2618
    %v2642 = vpop.f32.mrf.mxu0
    %v2643 = vadd.f32 %v2570, %v2642
    %v2644 = vpop.f32.mrf.mxu0
    %2645 = vdwg.mxu0
    %2646 = vmatpush.bf16.msra.mxu0 0
    %2647 = vmatpush.bf16.msra.mxu0 0
    %2648 = vmatpush.bf16.msra.mxu0 0
    %2649 = vmatpush.bf16.msra.mxu0 0
    %2650 = vmatpush.bf16.msra.mxu0 0
    %2651 = vmatpush.bf16.msra.mxu0 0
    %2652 = vmatpush.bf16.msra.mxu0 %v2607
    %2653 = vmatpush.bf16.msra.mxu0 %v2603
    %2654 = vmatmul.bf16.gmra.mxu0 %v2618
    %v2655 = vpop.f32.mrf.mxu0
    %v2656 = vadd.f32 %v2571, %v2655
    %v2657 = vpop.f32.mrf.mxu0
    %2658 = vdwg.mxu0
    %2659 = vmatpush.bf16.msra.mxu0 0
    %2660 = vmatpush.bf16.msra.mxu0 0
    %2661 = vmatpush.bf16.msra.mxu0 0
    %2662 = vmatpush.bf16.msra.mxu0 0
    %2663 = vmatpush.bf16.msra.mxu0 0
    %2664 = vmatpush.bf16.msra.mxu0 0
    %2665 = vmatpush.bf16.msra.mxu0 %v2608
    %2666 = vmatpush.bf16.msra.mxu0 %v2604
    %2667 = vmatmul.bf16.gmra.mxu0 %v2618
    %v2668 = vpop.f32.mrf.mxu0
    %v2669 = vadd.f32 %v2572, %v2668
    %v2670 = vpop.f32.mrf.mxu0
    %2671 = vdwg.mxu0
    %v2672 = vmax.f32 %v2630, 0.0
    %v2673 = vmax.f32 %v2643, 0.0
    %v2674 = vmax.f32 %v2656, 0.0
    %v2675 = vmax.f32 %v2669, 0.0
    %v2680 = vrot.slane %v2673, 6
    %v2681 = vrot.slane %v2674, 4
    %v2682 = vrot.slane %v2675, 2
    %vm2683 = vcmask 1041408
    %v2684 = vsel %vm2683, %v2672, %v2680
    %vm2685 = vcmask 1045508
    %v2686 = vsel %vm2685, %v2681, %v2682
    %v2687 = vsel %vm396, %v2684, %v2686
    %2689 = vst [vmem:[#allocation2] sm:$0xff] %v2687
    // Predicated region
    $region94: #{gcn_forward.1} parent=1 // pred_check
      _
    $region95: #{gcn_forward.1} parent=1 // pred_check_branch
      %2691 = sbr.rel (0) target = $region97
    $region96: #{gcn_forward.1} parent=1 // pred_region
      %2693 = vsyncadd [#allocation3], 0
      %s2695 = sshll.u32 [#allocation2], 4
      %s2696 = int_to_ptr.vmem [resolvable:$true] %s2695
      %s2697 = sshll.u32 %s23, 4
      %s2698 = int_to_ptr.hbm [resolvable:$true] %s2697
      %2700 = dma.vmem_to_hbm [thread:$0]  %s2696, 128, %s2698, [#allocation3]
    $region97: #{gcn_forward.1} parent=1 // pred_fallthru
      _
    // Predicated region
    $region98: #{gcn_forward.1} parent=1 // pred_check
      _
    $region99: #{gcn_forward.1} parent=1 // pred_check_branch
      %2702 = sbr.rel (0) target = $region101
    $region100: #{gcn_forward.1} parent=1 // pred_region
      %2704 = dma.done [#allocation3], 128
    $region101: #{gcn_forward.1} parent=1 // pred_fallthru
      _
    %2705 = vsyncpa [#allocation3], 1

</llo_original>
